<compile_context>
chip_gen: v6e
topology: v6e:2x2x1
jax: 0.10.0
libtpu: 0.0.40
codegen_flags: <defaults>
</compile_context>

<pallas_src>
import numpy as np
import jax
import jax.numpy as jnp
from jax.experimental import pallas as pl
from jax.experimental.pallas import tpu as pltpu

LANE = 128    # vreg lane width
CHUNK = 64    # sublane rows per in-kernel slab (8 vregs per int32 array)


def compute_combinations(M, N):
    """Pascal triangle table, same as the PyTorch module (int64)."""
    c = np.zeros((M + 1, N + 1), dtype=np.int64)
    for m in range(0, M + 1):
        c[m, 0] = 1
    for m in range(1, M + 1):
        for n in range(1, min(m, N) + 1):
            c[m, n] = c[m - 1, n - 1] + c[m - 1, n]
    return c


def _make_mapping_kernel(comb_np, M, N):
    """Build a kernel with the (reversed, pruned) Pascal table baked in."""
    c0 = int(comb_np[M - 1, N])  # site 0: left == N always -> constant

    # pruned[i] = list of (n, comb[M-1-i, n]) restricted to the feasible
    # `left` range at site i for inputs with exactly N ones:
    #   left >= N - i (at most i ones placed so far)
    #   left >= 1     (if x_i == 1 matters; left == 0 -> x_i == 0 -> contributes 0)
    #   left <= min(N, M-1-i)  (table entries above are zero anyway)
    pruned = []
    for i in range(1, M):
        lo = max(1, N - i)
        hi = min(N, M - 1 - i)
        row = [(n, int(comb_np[M - 1 - i, n]))
               for n in range(lo, hi + 1) if int(comb_np[M - 1 - i, n]) != 0]
        pruned.append((i, row))
    # trailing sites that contribute nothing can be dropped entirely
    while pruned and not pruned[-1][1]:
        pruned.pop()

    if c0 == 0 and not pruned:
        # degenerate space (e.g. N >= M): the rank is always 0
        def zero_kernel(x_ref, o_ref):
            o_ref[...] = jnp.zeros(o_ref.shape, jnp.int32)
        return zero_kernel

    def kernel(x_ref, o_ref):
        # x_ref: [cps, M, CHUNK, LANE] int8 (0/1 occupations)
        # o_ref: [cps, CHUNK, LANE]    int32 (combinatorial rank)
        n_chunks = x_ref.shape[0]
        shape = (x_ref.shape[2], x_ref.shape[3])

        # One 64-sublane slab at a time: bounds vreg live ranges (scf.for)
        # while the big grid block keeps the DMA efficient.
        @pl.loop(0, n_chunks)
        def _(j):
            x0 = x_ref[j, 0].astype(jnp.int32)          # [CHUNK, LANE]
            if c0 != 0:
                index = x0 * jnp.int32(c0)
            else:
                index = jnp.zeros(shape, jnp.int32)
            left = jnp.int32(N) - x0

            # sites are few and static -> fully unrolled (serial dep via left)
            for i, row in pruned:
                xi = x_ref[j, i].astype(jnp.int32)      # [CHUNK, LANE]
                if row:
                    # comb[M-1-i, left] via constant compare/select chain
                    # (VALU only; zero / infeasible entries skipped at trace time)
                    val = jnp.zeros(shape, jnp.int32)
                    for n, c in row:
                        val = jnp.where(left == n, jnp.int32(c), val)
                    index = index + val * xi
                left = left - xi

            o_ref[j] = index

    return kernel


def mapping_forward(x, comb, *, chunks_per_step=16):
    """x: [B, M] binary array, comb: [M+1, N+1] table. Returns [B] ranks.

    Output dtype is int32 (cast to int64 only if x64 is enabled); a trace-time
    assert guarantees the values are exactly representable in int32.
    """
    B, M = x.shape
    comb_np = np.asarray(comb)
    Mp1, Np1 = comb_np.shape
    N = Np1 - 1
    assert Mp1 == M + 1, "comb table does not match number of sites"
    assert int(comb_np.max()) < 2**31, (
        "comb values exceed int32; int32 accumulation would overflow")

    rows_per_chunk = CHUNK * LANE                     # 8192 batch rows / chunk
    Bc = max(1, -(-B // rows_per_chunk))              # chunks needed
    if Bc >= 2:
        # cap the tile so there are >=2 grid steps (v7x: use both TensorCores)
        cps = max(1, min(chunks_per_step, -(-Bc // 2)))
    else:
        cps = 1
    grid_n = -(-Bc // cps)
    Bc_pad = grid_n * cps
    Bp = Bc_pad * rows_per_chunk

    # Pad + cast to int8 in one copy (4x less wrapper-side data movement);
    # padded rows are all-zero occupations -> index 0 (sliced off below).
    xp8 = jnp.zeros((Bp, M), jnp.int8).at[:B, :].set(x.astype(jnp.int8))
    # [Bp, M] -> [Bc_pad, CHUNK, LANE, M] -> [Bc_pad, M, CHUNK, LANE]:
    # chunk outermost, then site, batch on the (sublane, lane) plane.
    x4 = jnp.transpose(xp8.reshape(Bc_pad, CHUNK, LANE, M), (0, 3, 1, 2))

    kernel = _make_mapping_kernel(comb_np, M, N)

    out3 = pl.pallas_call(
        kernel,
        out_shape=jax.ShapeDtypeStruct((Bc_pad, CHUNK, LANE), jnp.int32),
        grid=(grid_n,),
        in_specs=[
            # int8 block: second-minor dim CHUNK=64 is a multiple of 32 as required
            pl.BlockSpec((cps, M, CHUNK, LANE), lambda g: (g, 0, 0, 0)),
        ],
        out_specs=pl.BlockSpec((cps, CHUNK, LANE), lambda g: (g, 0, 0)),
        compiler_params=pltpu.CompilerParams(
            dimension_semantics=("parallel",)),
    )(x4)

    out = out3.reshape(Bp)[:B]
    if jax.config.jax_enable_x64:
        # Match the PyTorch int64 output dtype when x64 is available.
        out = out.astype(jnp.int64)
    return out


def _reference(x_np, comb_np, M, N):
    B = x_np.shape[0]
    idx = np.zeros(B, dtype=np.int64)
    left = np.full(B, N, dtype=np.int64)
    for i in range(M):
        xi = x_np[:, i].astype(np.int64)
        idx += comb_np[M - 1 - i, left] * xi
        left -= xi
    return idx


if __name__ == "__main__":
    M, N, B = 16, 8, 8  # small shapes: 16 sites, 8 particles, batch 8
    comb = compute_combinations(M, N)

    # deterministic binary inputs: each row has exactly N ones, shuffled.
    key = jax.random.PRNGKey(0)
    base = np.zeros((B, M), dtype=np.int32)
    base[:, :N] = 1
    keys = jax.random.split(key, B)
    rows = [jax.random.permutation(keys[b], jnp.asarray(base[b])) for b in range(B)]
    x = jnp.stack(rows).astype(jnp.int32)

    out = mapping_forward(x, comb)
    out = jax.block_until_ready(out)

    ref = _reference(np.asarray(x), comb, M, N)
    assert out.shape == (B,)
    assert np.array_equal(np.asarray(out).astype(np.int64), ref), (
        np.asarray(out), ref)

    print("KERNEL_OK")
</pallas_src>

<mosaic_0001>
module attributes {stable_mosaic.version = 11 : i64} {
  func.func @kernel(%arg0: i32, %arg1: memref<1x16x64x128xi8, #tpu.memory_space<vmem>>, %arg2: memref<1x64x128xi32, #tpu.memory_space<vmem>>) attributes {dimension_semantics = [#tpu.dimension_semantics<parallel>], iteration_bounds = array<i64: 1>, scalar_prefetch = 0 : i64, scratch_operands = 0 : i64, tpu.core_type = #tpu.core_type<tc>, window_params = [{transform_indices = @transform_0, window_bounds = array<i64: 1, 16, 64, 128>}, {transform_indices = @transform_1, window_bounds = array<i64: 1, 64, 128>}]} {
    %c0_i32 = arith.constant 0 : i32
    %c1_i32 = arith.constant 1 : i32
    %0 = arith.muli %c0_i32, %c1_i32 : i32
    %c0_i32_0 = arith.constant 0 : i32
    %1 = arith.addi %c0_i32_0, %0 : i32
    %2 = arith.index_cast %1 : i32 to index
    %c0 = arith.constant 0 : index
    %c0_1 = arith.constant 0 : index
    %c0_2 = arith.constant 0 : index
    %3 = vector.load %arg1[%2, %c0, %c0_1, %c0_2] : memref<1x16x64x128xi8, #tpu.memory_space<vmem>>, vector<1x1x64x128xi8>
    %4 = vector.shape_cast %3 : vector<1x1x64x128xi8> to vector<64x128xi8>
    %5 = arith.extsi %4 : vector<64x128xi8> to vector<64x128xi32>
    %c6435_i32 = arith.constant 6435 : i32
    %6 = vector.broadcast %c6435_i32 : i32 to vector<64x128xi32>
    %7 = arith.muli %5, %6 : vector<64x128xi32>
    %c8_i32 = arith.constant 8 : i32
    %8 = vector.broadcast %c8_i32 : i32 to vector<64x128xi32>
    %9 = arith.subi %8, %5 : vector<64x128xi32>
    %10 = arith.index_cast %1 : i32 to index
    %c1 = arith.constant 1 : index
    %c0_3 = arith.constant 0 : index
    %c0_4 = arith.constant 0 : index
    %11 = vector.load %arg1[%10, %c1, %c0_3, %c0_4] : memref<1x16x64x128xi8, #tpu.memory_space<vmem>>, vector<1x1x64x128xi8>
    %12 = vector.shape_cast %11 : vector<1x1x64x128xi8> to vector<64x128xi8>
    %13 = arith.extsi %12 : vector<64x128xi8> to vector<64x128xi32>
    %c0_i32_5 = arith.constant 0 : i32
    %14 = vector.broadcast %c0_i32_5 : i32 to vector<64x128xi32>
    %c7_i32 = arith.constant 7 : i32
    %15 = vector.broadcast %c7_i32 : i32 to vector<64x128xi32>
    %16 = arith.cmpi eq, %9, %15 : vector<64x128xi32>
    %c3432_i32 = arith.constant 3432 : i32
    %17 = vector.broadcast %c3432_i32 : i32 to vector<64x128xi32>
    %18 = arith.select %16, %17, %14 : vector<64x128xi1>, vector<64x128xi32>
    %c8_i32_6 = arith.constant 8 : i32
    %19 = vector.broadcast %c8_i32_6 : i32 to vector<64x128xi32>
    %20 = arith.cmpi eq, %9, %19 : vector<64x128xi32>
    %c3003_i32 = arith.constant 3003 : i32
    %21 = vector.broadcast %c3003_i32 : i32 to vector<64x128xi32>
    %22 = arith.select %20, %21, %18 : vector<64x128xi1>, vector<64x128xi32>
    %23 = arith.muli %22, %13 : vector<64x128xi32>
    %24 = arith.addi %7, %23 : vector<64x128xi32>
    %25 = arith.subi %9, %13 : vector<64x128xi32>
    %26 = arith.index_cast %1 : i32 to index
    %c2 = arith.constant 2 : index
    %c0_7 = arith.constant 0 : index
    %c0_8 = arith.constant 0 : index
    %27 = vector.load %arg1[%26, %c2, %c0_7, %c0_8] : memref<1x16x64x128xi8, #tpu.memory_space<vmem>>, vector<1x1x64x128xi8>
    %28 = vector.shape_cast %27 : vector<1x1x64x128xi8> to vector<64x128xi8>
    %29 = arith.extsi %28 : vector<64x128xi8> to vector<64x128xi32>
    %c0_i32_9 = arith.constant 0 : i32
    %30 = vector.broadcast %c0_i32_9 : i32 to vector<64x128xi32>
    %c6_i32 = arith.constant 6 : i32
    %31 = vector.broadcast %c6_i32 : i32 to vector<64x128xi32>
    %32 = arith.cmpi eq, %25, %31 : vector<64x128xi32>
    %c1716_i32 = arith.constant 1716 : i32
    %33 = vector.broadcast %c1716_i32 : i32 to vector<64x128xi32>
    %34 = arith.select %32, %33, %30 : vector<64x128xi1>, vector<64x128xi32>
    %c7_i32_10 = arith.constant 7 : i32
    %35 = vector.broadcast %c7_i32_10 : i32 to vector<64x128xi32>
    %36 = arith.cmpi eq, %25, %35 : vector<64x128xi32>
    %c1716_i32_11 = arith.constant 1716 : i32
    %37 = vector.broadcast %c1716_i32_11 : i32 to vector<64x128xi32>
    %38 = arith.select %36, %37, %34 : vector<64x128xi1>, vector<64x128xi32>
    %c8_i32_12 = arith.constant 8 : i32
    %39 = vector.broadcast %c8_i32_12 : i32 to vector<64x128xi32>
    %40 = arith.cmpi eq, %25, %39 : vector<64x128xi32>
    %c1287_i32 = arith.constant 1287 : i32
    %41 = vector.broadcast %c1287_i32 : i32 to vector<64x128xi32>
    %42 = arith.select %40, %41, %38 : vector<64x128xi1>, vector<64x128xi32>
    %43 = arith.muli %42, %29 : vector<64x128xi32>
    %44 = arith.addi %24, %43 : vector<64x128xi32>
    %45 = arith.subi %25, %29 : vector<64x128xi32>
    %46 = arith.index_cast %1 : i32 to index
    %c3 = arith.constant 3 : index
    %c0_13 = arith.constant 0 : index
    %c0_14 = arith.constant 0 : index
    %47 = vector.load %arg1[%46, %c3, %c0_13, %c0_14] : memref<1x16x64x128xi8, #tpu.memory_space<vmem>>, vector<1x1x64x128xi8>
    %48 = vector.shape_cast %47 : vector<1x1x64x128xi8> to vector<64x128xi8>
    %49 = arith.extsi %48 : vector<64x128xi8> to vector<64x128xi32>
    %c0_i32_15 = arith.constant 0 : i32
    %50 = vector.broadcast %c0_i32_15 : i32 to vector<64x128xi32>
    %c5_i32 = arith.constant 5 : i32
    %51 = vector.broadcast %c5_i32 : i32 to vector<64x128xi32>
    %52 = arith.cmpi eq, %45, %51 : vector<64x128xi32>
    %c792_i32 = arith.constant 792 : i32
    %53 = vector.broadcast %c792_i32 : i32 to vector<64x128xi32>
    %54 = arith.select %52, %53, %50 : vector<64x128xi1>, vector<64x128xi32>
    %c6_i32_16 = arith.constant 6 : i32
    %55 = vector.broadcast %c6_i32_16 : i32 to vector<64x128xi32>
    %56 = arith.cmpi eq, %45, %55 : vector<64x128xi32>
    %c924_i32 = arith.constant 924 : i32
    %57 = vector.broadcast %c924_i32 : i32 to vector<64x128xi32>
    %58 = arith.select %56, %57, %54 : vector<64x128xi1>, vector<64x128xi32>
    %c7_i32_17 = arith.constant 7 : i32
    %59 = vector.broadcast %c7_i32_17 : i32 to vector<64x128xi32>
    %60 = arith.cmpi eq, %45, %59 : vector<64x128xi32>
    %c792_i32_18 = arith.constant 792 : i32
    %61 = vector.broadcast %c792_i32_18 : i32 to vector<64x128xi32>
    %62 = arith.select %60, %61, %58 : vector<64x128xi1>, vector<64x128xi32>
    %c8_i32_19 = arith.constant 8 : i32
    %63 = vector.broadcast %c8_i32_19 : i32 to vector<64x128xi32>
    %64 = arith.cmpi eq, %45, %63 : vector<64x128xi32>
    %c495_i32 = arith.constant 495 : i32
    %65 = vector.broadcast %c495_i32 : i32 to vector<64x128xi32>
    %66 = arith.select %64, %65, %62 : vector<64x128xi1>, vector<64x128xi32>
    %67 = arith.muli %66, %49 : vector<64x128xi32>
    %68 = arith.addi %44, %67 : vector<64x128xi32>
    %69 = arith.subi %45, %49 : vector<64x128xi32>
    %70 = arith.index_cast %1 : i32 to index
    %c4 = arith.constant 4 : index
    %c0_20 = arith.constant 0 : index
    %c0_21 = arith.constant 0 : index
    %71 = vector.load %arg1[%70, %c4, %c0_20, %c0_21] : memref<1x16x64x128xi8, #tpu.memory_space<vmem>>, vector<1x1x64x128xi8>
    %72 = vector.shape_cast %71 : vector<1x1x64x128xi8> to vector<64x128xi8>
    %73 = arith.extsi %72 : vector<64x128xi8> to vector<64x128xi32>
    %c0_i32_22 = arith.constant 0 : i32
    %74 = vector.broadcast %c0_i32_22 : i32 to vector<64x128xi32>
    %c4_i32 = arith.constant 4 : i32
    %75 = vector.broadcast %c4_i32 : i32 to vector<64x128xi32>
    %76 = arith.cmpi eq, %69, %75 : vector<64x128xi32>
    %c330_i32 = arith.constant 330 : i32
    %77 = vector.broadcast %c330_i32 : i32 to vector<64x128xi32>
    %78 = arith.select %76, %77, %74 : vector<64x128xi1>, vector<64x128xi32>
    %c5_i32_23 = arith.constant 5 : i32
    %79 = vector.broadcast %c5_i32_23 : i32 to vector<64x128xi32>
    %80 = arith.cmpi eq, %69, %79 : vector<64x128xi32>
    %c462_i32 = arith.constant 462 : i32
    %81 = vector.broadcast %c462_i32 : i32 to vector<64x128xi32>
    %82 = arith.select %80, %81, %78 : vector<64x128xi1>, vector<64x128xi32>
    %c6_i32_24 = arith.constant 6 : i32
    %83 = vector.broadcast %c6_i32_24 : i32 to vector<64x128xi32>
    %84 = arith.cmpi eq, %69, %83 : vector<64x128xi32>
    %c462_i32_25 = arith.constant 462 : i32
    %85 = vector.broadcast %c462_i32_25 : i32 to vector<64x128xi32>
    %86 = arith.select %84, %85, %82 : vector<64x128xi1>, vector<64x128xi32>
    %c7_i32_26 = arith.constant 7 : i32
    %87 = vector.broadcast %c7_i32_26 : i32 to vector<64x128xi32>
    %88 = arith.cmpi eq, %69, %87 : vector<64x128xi32>
    %c330_i32_27 = arith.constant 330 : i32
    %89 = vector.broadcast %c330_i32_27 : i32 to vector<64x128xi32>
    %90 = arith.select %88, %89, %86 : vector<64x128xi1>, vector<64x128xi32>
    %c8_i32_28 = arith.constant 8 : i32
    %91 = vector.broadcast %c8_i32_28 : i32 to vector<64x128xi32>
    %92 = arith.cmpi eq, %69, %91 : vector<64x128xi32>
    %c165_i32 = arith.constant 165 : i32
    %93 = vector.broadcast %c165_i32 : i32 to vector<64x128xi32>
    %94 = arith.select %92, %93, %90 : vector<64x128xi1>, vector<64x128xi32>
    %95 = arith.muli %94, %73 : vector<64x128xi32>
    %96 = arith.addi %68, %95 : vector<64x128xi32>
    %97 = arith.subi %69, %73 : vector<64x128xi32>
    %98 = arith.index_cast %1 : i32 to index
    %c5 = arith.constant 5 : index
    %c0_29 = arith.constant 0 : index
    %c0_30 = arith.constant 0 : index
    %99 = vector.load %arg1[%98, %c5, %c0_29, %c0_30] : memref<1x16x64x128xi8, #tpu.memory_space<vmem>>, vector<1x1x64x128xi8>
    %100 = vector.shape_cast %99 : vector<1x1x64x128xi8> to vector<64x128xi8>
    %101 = arith.extsi %100 : vector<64x128xi8> to vector<64x128xi32>
    %c0_i32_31 = arith.constant 0 : i32
    %102 = vector.broadcast %c0_i32_31 : i32 to vector<64x128xi32>
    %c3_i32 = arith.constant 3 : i32
    %103 = vector.broadcast %c3_i32 : i32 to vector<64x128xi32>
    %104 = arith.cmpi eq, %97, %103 : vector<64x128xi32>
    %c120_i32 = arith.constant 120 : i32
    %105 = vector.broadcast %c120_i32 : i32 to vector<64x128xi32>
    %106 = arith.select %104, %105, %102 : vector<64x128xi1>, vector<64x128xi32>
    %c4_i32_32 = arith.constant 4 : i32
    %107 = vector.broadcast %c4_i32_32 : i32 to vector<64x128xi32>
    %108 = arith.cmpi eq, %97, %107 : vector<64x128xi32>
    %c210_i32 = arith.constant 210 : i32
    %109 = vector.broadcast %c210_i32 : i32 to vector<64x128xi32>
    %110 = arith.select %108, %109, %106 : vector<64x128xi1>, vector<64x128xi32>
    %c5_i32_33 = arith.constant 5 : i32
    %111 = vector.broadcast %c5_i32_33 : i32 to vector<64x128xi32>
    %112 = arith.cmpi eq, %97, %111 : vector<64x128xi32>
    %c252_i32 = arith.constant 252 : i32
    %113 = vector.broadcast %c252_i32 : i32 to vector<64x128xi32>
    %114 = arith.select %112, %113, %110 : vector<64x128xi1>, vector<64x128xi32>
    %c6_i32_34 = arith.constant 6 : i32
    %115 = vector.broadcast %c6_i32_34 : i32 to vector<64x128xi32>
    %116 = arith.cmpi eq, %97, %115 : vector<64x128xi32>
    %c210_i32_35 = arith.constant 210 : i32
    %117 = vector.broadcast %c210_i32_35 : i32 to vector<64x128xi32>
    %118 = arith.select %116, %117, %114 : vector<64x128xi1>, vector<64x128xi32>
    %c7_i32_36 = arith.constant 7 : i32
    %119 = vector.broadcast %c7_i32_36 : i32 to vector<64x128xi32>
    %120 = arith.cmpi eq, %97, %119 : vector<64x128xi32>
    %c120_i32_37 = arith.constant 120 : i32
    %121 = vector.broadcast %c120_i32_37 : i32 to vector<64x128xi32>
    %122 = arith.select %120, %121, %118 : vector<64x128xi1>, vector<64x128xi32>
    %c8_i32_38 = arith.constant 8 : i32
    %123 = vector.broadcast %c8_i32_38 : i32 to vector<64x128xi32>
    %124 = arith.cmpi eq, %97, %123 : vector<64x128xi32>
    %c45_i32 = arith.constant 45 : i32
    %125 = vector.broadcast %c45_i32 : i32 to vector<64x128xi32>
    %126 = arith.select %124, %125, %122 : vector<64x128xi1>, vector<64x128xi32>
    %127 = arith.muli %126, %101 : vector<64x128xi32>
    %128 = arith.addi %96, %127 : vector<64x128xi32>
    %129 = arith.subi %97, %101 : vector<64x128xi32>
    %130 = arith.index_cast %1 : i32 to index
    %c6 = arith.constant 6 : index
    %c0_39 = arith.constant 0 : index
    %c0_40 = arith.constant 0 : index
    %131 = vector.load %arg1[%130, %c6, %c0_39, %c0_40] : memref<1x16x64x128xi8, #tpu.memory_space<vmem>>, vector<1x1x64x128xi8>
    %132 = vector.shape_cast %131 : vector<1x1x64x128xi8> to vector<64x128xi8>
    %133 = arith.extsi %132 : vector<64x128xi8> to vector<64x128xi32>
    %c0_i32_41 = arith.constant 0 : i32
    %134 = vector.broadcast %c0_i32_41 : i32 to vector<64x128xi32>
    %c2_i32 = arith.constant 2 : i32
    %135 = vector.broadcast %c2_i32 : i32 to vector<64x128xi32>
    %136 = arith.cmpi eq, %129, %135 : vector<64x128xi32>
    %c36_i32 = arith.constant 36 : i32
    %137 = vector.broadcast %c36_i32 : i32 to vector<64x128xi32>
    %138 = arith.select %136, %137, %134 : vector<64x128xi1>, vector<64x128xi32>
    %c3_i32_42 = arith.constant 3 : i32
    %139 = vector.broadcast %c3_i32_42 : i32 to vector<64x128xi32>
    %140 = arith.cmpi eq, %129, %139 : vector<64x128xi32>
    %c84_i32 = arith.constant 84 : i32
    %141 = vector.broadcast %c84_i32 : i32 to vector<64x128xi32>
    %142 = arith.select %140, %141, %138 : vector<64x128xi1>, vector<64x128xi32>
    %c4_i32_43 = arith.constant 4 : i32
    %143 = vector.broadcast %c4_i32_43 : i32 to vector<64x128xi32>
    %144 = arith.cmpi eq, %129, %143 : vector<64x128xi32>
    %c126_i32 = arith.constant 126 : i32
    %145 = vector.broadcast %c126_i32 : i32 to vector<64x128xi32>
    %146 = arith.select %144, %145, %142 : vector<64x128xi1>, vector<64x128xi32>
    %c5_i32_44 = arith.constant 5 : i32
    %147 = vector.broadcast %c5_i32_44 : i32 to vector<64x128xi32>
    %148 = arith.cmpi eq, %129, %147 : vector<64x128xi32>
    %c126_i32_45 = arith.constant 126 : i32
    %149 = vector.broadcast %c126_i32_45 : i32 to vector<64x128xi32>
    %150 = arith.select %148, %149, %146 : vector<64x128xi1>, vector<64x128xi32>
    %c6_i32_46 = arith.constant 6 : i32
    %151 = vector.broadcast %c6_i32_46 : i32 to vector<64x128xi32>
    %152 = arith.cmpi eq, %129, %151 : vector<64x128xi32>
    %c84_i32_47 = arith.constant 84 : i32
    %153 = vector.broadcast %c84_i32_47 : i32 to vector<64x128xi32>
    %154 = arith.select %152, %153, %150 : vector<64x128xi1>, vector<64x128xi32>
    %c7_i32_48 = arith.constant 7 : i32
    %155 = vector.broadcast %c7_i32_48 : i32 to vector<64x128xi32>
    %156 = arith.cmpi eq, %129, %155 : vector<64x128xi32>
    %c36_i32_49 = arith.constant 36 : i32
    %157 = vector.broadcast %c36_i32_49 : i32 to vector<64x128xi32>
    %158 = arith.select %156, %157, %154 : vector<64x128xi1>, vector<64x128xi32>
    %c8_i32_50 = arith.constant 8 : i32
    %159 = vector.broadcast %c8_i32_50 : i32 to vector<64x128xi32>
    %160 = arith.cmpi eq, %129, %159 : vector<64x128xi32>
    %c9_i32 = arith.constant 9 : i32
    %161 = vector.broadcast %c9_i32 : i32 to vector<64x128xi32>
    %162 = arith.select %160, %161, %158 : vector<64x128xi1>, vector<64x128xi32>
    %163 = arith.muli %162, %133 : vector<64x128xi32>
    %164 = arith.addi %128, %163 : vector<64x128xi32>
    %165 = arith.subi %129, %133 : vector<64x128xi32>
    %166 = arith.index_cast %1 : i32 to index
    %c7 = arith.constant 7 : index
    %c0_51 = arith.constant 0 : index
    %c0_52 = arith.constant 0 : index
    %167 = vector.load %arg1[%166, %c7, %c0_51, %c0_52] : memref<1x16x64x128xi8, #tpu.memory_space<vmem>>, vector<1x1x64x128xi8>
    %168 = vector.shape_cast %167 : vector<1x1x64x128xi8> to vector<64x128xi8>
    %169 = arith.extsi %168 : vector<64x128xi8> to vector<64x128xi32>
    %c0_i32_53 = arith.constant 0 : i32
    %170 = vector.broadcast %c0_i32_53 : i32 to vector<64x128xi32>
    %c1_i32_54 = arith.constant 1 : i32
    %171 = vector.broadcast %c1_i32_54 : i32 to vector<64x128xi32>
    %172 = arith.cmpi eq, %165, %171 : vector<64x128xi32>
    %c8_i32_55 = arith.constant 8 : i32
    %173 = vector.broadcast %c8_i32_55 : i32 to vector<64x128xi32>
    %174 = arith.select %172, %173, %170 : vector<64x128xi1>, vector<64x128xi32>
    %c2_i32_56 = arith.constant 2 : i32
    %175 = vector.broadcast %c2_i32_56 : i32 to vector<64x128xi32>
    %176 = arith.cmpi eq, %165, %175 : vector<64x128xi32>
    %c28_i32 = arith.constant 28 : i32
    %177 = vector.broadcast %c28_i32 : i32 to vector<64x128xi32>
    %178 = arith.select %176, %177, %174 : vector<64x128xi1>, vector<64x128xi32>
    %c3_i32_57 = arith.constant 3 : i32
    %179 = vector.broadcast %c3_i32_57 : i32 to vector<64x128xi32>
    %180 = arith.cmpi eq, %165, %179 : vector<64x128xi32>
    %c56_i32 = arith.constant 56 : i32
    %181 = vector.broadcast %c56_i32 : i32 to vector<64x128xi32>
    %182 = arith.select %180, %181, %178 : vector<64x128xi1>, vector<64x128xi32>
    %c4_i32_58 = arith.constant 4 : i32
    %183 = vector.broadcast %c4_i32_58 : i32 to vector<64x128xi32>
    %184 = arith.cmpi eq, %165, %183 : vector<64x128xi32>
    %c70_i32 = arith.constant 70 : i32
    %185 = vector.broadcast %c70_i32 : i32 to vector<64x128xi32>
    %186 = arith.select %184, %185, %182 : vector<64x128xi1>, vector<64x128xi32>
    %c5_i32_59 = arith.constant 5 : i32
    %187 = vector.broadcast %c5_i32_59 : i32 to vector<64x128xi32>
    %188 = arith.cmpi eq, %165, %187 : vector<64x128xi32>
    %c56_i32_60 = arith.constant 56 : i32
    %189 = vector.broadcast %c56_i32_60 : i32 to vector<64x128xi32>
    %190 = arith.select %188, %189, %186 : vector<64x128xi1>, vector<64x128xi32>
    %c6_i32_61 = arith.constant 6 : i32
    %191 = vector.broadcast %c6_i32_61 : i32 to vector<64x128xi32>
    %192 = arith.cmpi eq, %165, %191 : vector<64x128xi32>
    %c28_i32_62 = arith.constant 28 : i32
    %193 = vector.broadcast %c28_i32_62 : i32 to vector<64x128xi32>
    %194 = arith.select %192, %193, %190 : vector<64x128xi1>, vector<64x128xi32>
    %c7_i32_63 = arith.constant 7 : i32
    %195 = vector.broadcast %c7_i32_63 : i32 to vector<64x128xi32>
    %196 = arith.cmpi eq, %165, %195 : vector<64x128xi32>
    %c8_i32_64 = arith.constant 8 : i32
    %197 = vector.broadcast %c8_i32_64 : i32 to vector<64x128xi32>
    %198 = arith.select %196, %197, %194 : vector<64x128xi1>, vector<64x128xi32>
    %c8_i32_65 = arith.constant 8 : i32
    %199 = vector.broadcast %c8_i32_65 : i32 to vector<64x128xi32>
    %200 = arith.cmpi eq, %165, %199 : vector<64x128xi32>
    %c1_i32_66 = arith.constant 1 : i32
    %201 = vector.broadcast %c1_i32_66 : i32 to vector<64x128xi32>
    %202 = arith.select %200, %201, %198 : vector<64x128xi1>, vector<64x128xi32>
    %203 = arith.muli %202, %169 : vector<64x128xi32>
    %204 = arith.addi %164, %203 : vector<64x128xi32>
    %205 = arith.subi %165, %169 : vector<64x128xi32>
    %206 = arith.index_cast %1 : i32 to index
    %c8 = arith.constant 8 : index
    %c0_67 = arith.constant 0 : index
    %c0_68 = arith.constant 0 : index
    %207 = vector.load %arg1[%206, %c8, %c0_67, %c0_68] : memref<1x16x64x128xi8, #tpu.memory_space<vmem>>, vector<1x1x64x128xi8>
    %208 = vector.shape_cast %207 : vector<1x1x64x128xi8> to vector<64x128xi8>
    %209 = arith.extsi %208 : vector<64x128xi8> to vector<64x128xi32>
    %c0_i32_69 = arith.constant 0 : i32
    %210 = vector.broadcast %c0_i32_69 : i32 to vector<64x128xi32>
    %c1_i32_70 = arith.constant 1 : i32
    %211 = vector.broadcast %c1_i32_70 : i32 to vector<64x128xi32>
    %212 = arith.cmpi eq, %205, %211 : vector<64x128xi32>
    %c7_i32_71 = arith.constant 7 : i32
    %213 = vector.broadcast %c7_i32_71 : i32 to vector<64x128xi32>
    %214 = arith.select %212, %213, %210 : vector<64x128xi1>, vector<64x128xi32>
    %c2_i32_72 = arith.constant 2 : i32
    %215 = vector.broadcast %c2_i32_72 : i32 to vector<64x128xi32>
    %216 = arith.cmpi eq, %205, %215 : vector<64x128xi32>
    %c21_i32 = arith.constant 21 : i32
    %217 = vector.broadcast %c21_i32 : i32 to vector<64x128xi32>
    %218 = arith.select %216, %217, %214 : vector<64x128xi1>, vector<64x128xi32>
    %c3_i32_73 = arith.constant 3 : i32
    %219 = vector.broadcast %c3_i32_73 : i32 to vector<64x128xi32>
    %220 = arith.cmpi eq, %205, %219 : vector<64x128xi32>
    %c35_i32 = arith.constant 35 : i32
    %221 = vector.broadcast %c35_i32 : i32 to vector<64x128xi32>
    %222 = arith.select %220, %221, %218 : vector<64x128xi1>, vector<64x128xi32>
    %c4_i32_74 = arith.constant 4 : i32
    %223 = vector.broadcast %c4_i32_74 : i32 to vector<64x128xi32>
    %224 = arith.cmpi eq, %205, %223 : vector<64x128xi32>
    %c35_i32_75 = arith.constant 35 : i32
    %225 = vector.broadcast %c35_i32_75 : i32 to vector<64x128xi32>
    %226 = arith.select %224, %225, %222 : vector<64x128xi1>, vector<64x128xi32>
    %c5_i32_76 = arith.constant 5 : i32
    %227 = vector.broadcast %c5_i32_76 : i32 to vector<64x128xi32>
    %228 = arith.cmpi eq, %205, %227 : vector<64x128xi32>
    %c21_i32_77 = arith.constant 21 : i32
    %229 = vector.broadcast %c21_i32_77 : i32 to vector<64x128xi32>
    %230 = arith.select %228, %229, %226 : vector<64x128xi1>, vector<64x128xi32>
    %c6_i32_78 = arith.constant 6 : i32
    %231 = vector.broadcast %c6_i32_78 : i32 to vector<64x128xi32>
    %232 = arith.cmpi eq, %205, %231 : vector<64x128xi32>
    %c7_i32_79 = arith.constant 7 : i32
    %233 = vector.broadcast %c7_i32_79 : i32 to vector<64x128xi32>
    %234 = arith.select %232, %233, %230 : vector<64x128xi1>, vector<64x128xi32>
    %c7_i32_80 = arith.constant 7 : i32
    %235 = vector.broadcast %c7_i32_80 : i32 to vector<64x128xi32>
    %236 = arith.cmpi eq, %205, %235 : vector<64x128xi32>
    %c1_i32_81 = arith.constant 1 : i32
    %237 = vector.broadcast %c1_i32_81 : i32 to vector<64x128xi32>
    %238 = arith.select %236, %237, %234 : vector<64x128xi1>, vector<64x128xi32>
    %239 = arith.muli %238, %209 : vector<64x128xi32>
    %240 = arith.addi %204, %239 : vector<64x128xi32>
    %241 = arith.subi %205, %209 : vector<64x128xi32>
    %242 = arith.index_cast %1 : i32 to index
    %c9 = arith.constant 9 : index
    %c0_82 = arith.constant 0 : index
    %c0_83 = arith.constant 0 : index
    %243 = vector.load %arg1[%242, %c9, %c0_82, %c0_83] : memref<1x16x64x128xi8, #tpu.memory_space<vmem>>, vector<1x1x64x128xi8>
    %244 = vector.shape_cast %243 : vector<1x1x64x128xi8> to vector<64x128xi8>
    %245 = arith.extsi %244 : vector<64x128xi8> to vector<64x128xi32>
    %c0_i32_84 = arith.constant 0 : i32
    %246 = vector.broadcast %c0_i32_84 : i32 to vector<64x128xi32>
    %c1_i32_85 = arith.constant 1 : i32
    %247 = vector.broadcast %c1_i32_85 : i32 to vector<64x128xi32>
    %248 = arith.cmpi eq, %241, %247 : vector<64x128xi32>
    %c6_i32_86 = arith.constant 6 : i32
    %249 = vector.broadcast %c6_i32_86 : i32 to vector<64x128xi32>
    %250 = arith.select %248, %249, %246 : vector<64x128xi1>, vector<64x128xi32>
    %c2_i32_87 = arith.constant 2 : i32
    %251 = vector.broadcast %c2_i32_87 : i32 to vector<64x128xi32>
    %252 = arith.cmpi eq, %241, %251 : vector<64x128xi32>
    %c15_i32 = arith.constant 15 : i32
    %253 = vector.broadcast %c15_i32 : i32 to vector<64x128xi32>
    %254 = arith.select %252, %253, %250 : vector<64x128xi1>, vector<64x128xi32>
    %c3_i32_88 = arith.constant 3 : i32
    %255 = vector.broadcast %c3_i32_88 : i32 to vector<64x128xi32>
    %256 = arith.cmpi eq, %241, %255 : vector<64x128xi32>
    %c20_i32 = arith.constant 20 : i32
    %257 = vector.broadcast %c20_i32 : i32 to vector<64x128xi32>
    %258 = arith.select %256, %257, %254 : vector<64x128xi1>, vector<64x128xi32>
    %c4_i32_89 = arith.constant 4 : i32
    %259 = vector.broadcast %c4_i32_89 : i32 to vector<64x128xi32>
    %260 = arith.cmpi eq, %241, %259 : vector<64x128xi32>
    %c15_i32_90 = arith.constant 15 : i32
    %261 = vector.broadcast %c15_i32_90 : i32 to vector<64x128xi32>
    %262 = arith.select %260, %261, %258 : vector<64x128xi1>, vector<64x128xi32>
    %c5_i32_91 = arith.constant 5 : i32
    %263 = vector.broadcast %c5_i32_91 : i32 to vector<64x128xi32>
    %264 = arith.cmpi eq, %241, %263 : vector<64x128xi32>
    %c6_i32_92 = arith.constant 6 : i32
    %265 = vector.broadcast %c6_i32_92 : i32 to vector<64x128xi32>
    %266 = arith.select %264, %265, %262 : vector<64x128xi1>, vector<64x128xi32>
    %c6_i32_93 = arith.constant 6 : i32
    %267 = vector.broadcast %c6_i32_93 : i32 to vector<64x128xi32>
    %268 = arith.cmpi eq, %241, %267 : vector<64x128xi32>
    %c1_i32_94 = arith.constant 1 : i32
    %269 = vector.broadcast %c1_i32_94 : i32 to vector<64x128xi32>
    %270 = arith.select %268, %269, %266 : vector<64x128xi1>, vector<64x128xi32>
    %271 = arith.muli %270, %245 : vector<64x128xi32>
    %272 = arith.addi %240, %271 : vector<64x128xi32>
    %273 = arith.subi %241, %245 : vector<64x128xi32>
    %274 = arith.index_cast %1 : i32 to index
    %c10 = arith.constant 10 : index
    %c0_95 = arith.constant 0 : index
    %c0_96 = arith.constant 0 : index
    %275 = vector.load %arg1[%274, %c10, %c0_95, %c0_96] : memref<1x16x64x128xi8, #tpu.memory_space<vmem>>, vector<1x1x64x128xi8>
    %276 = vector.shape_cast %275 : vector<1x1x64x128xi8> to vector<64x128xi8>
    %277 = arith.extsi %276 : vector<64x128xi8> to vector<64x128xi32>
    %c0_i32_97 = arith.constant 0 : i32
    %278 = vector.broadcast %c0_i32_97 : i32 to vector<64x128xi32>
    %c1_i32_98 = arith.constant 1 : i32
    %279 = vector.broadcast %c1_i32_98 : i32 to vector<64x128xi32>
    %280 = arith.cmpi eq, %273, %279 : vector<64x128xi32>
    %c5_i32_99 = arith.constant 5 : i32
    %281 = vector.broadcast %c5_i32_99 : i32 to vector<64x128xi32>
    %282 = arith.select %280, %281, %278 : vector<64x128xi1>, vector<64x128xi32>
    %c2_i32_100 = arith.constant 2 : i32
    %283 = vector.broadcast %c2_i32_100 : i32 to vector<64x128xi32>
    %284 = arith.cmpi eq, %273, %283 : vector<64x128xi32>
    %c10_i32 = arith.constant 10 : i32
    %285 = vector.broadcast %c10_i32 : i32 to vector<64x128xi32>
    %286 = arith.select %284, %285, %282 : vector<64x128xi1>, vector<64x128xi32>
    %c3_i32_101 = arith.constant 3 : i32
    %287 = vector.broadcast %c3_i32_101 : i32 to vector<64x128xi32>
    %288 = arith.cmpi eq, %273, %287 : vector<64x128xi32>
    %c10_i32_102 = arith.constant 10 : i32
    %289 = vector.broadcast %c10_i32_102 : i32 to vector<64x128xi32>
    %290 = arith.select %288, %289, %286 : vector<64x128xi1>, vector<64x128xi32>
    %c4_i32_103 = arith.constant 4 : i32
    %291 = vector.broadcast %c4_i32_103 : i32 to vector<64x128xi32>
    %292 = arith.cmpi eq, %273, %291 : vector<64x128xi32>
    %c5_i32_104 = arith.constant 5 : i32
    %293 = vector.broadcast %c5_i32_104 : i32 to vector<64x128xi32>
    %294 = arith.select %292, %293, %290 : vector<64x128xi1>, vector<64x128xi32>
    %c5_i32_105 = arith.constant 5 : i32
    %295 = vector.broadcast %c5_i32_105 : i32 to vector<64x128xi32>
    %296 = arith.cmpi eq, %273, %295 : vector<64x128xi32>
    %c1_i32_106 = arith.constant 1 : i32
    %297 = vector.broadcast %c1_i32_106 : i32 to vector<64x128xi32>
    %298 = arith.select %296, %297, %294 : vector<64x128xi1>, vector<64x128xi32>
    %299 = arith.muli %298, %277 : vector<64x128xi32>
    %300 = arith.addi %272, %299 : vector<64x128xi32>
    %301 = arith.subi %273, %277 : vector<64x128xi32>
    %302 = arith.index_cast %1 : i32 to index
    %c11 = arith.constant 11 : index
    %c0_107 = arith.constant 0 : index
    %c0_108 = arith.constant 0 : index
    %303 = vector.load %arg1[%302, %c11, %c0_107, %c0_108] : memref<1x16x64x128xi8, #tpu.memory_space<vmem>>, vector<1x1x64x128xi8>
    %304 = vector.shape_cast %303 : vector<1x1x64x128xi8> to vector<64x128xi8>
    %305 = arith.extsi %304 : vector<64x128xi8> to vector<64x128xi32>
    %c0_i32_109 = arith.constant 0 : i32
    %306 = vector.broadcast %c0_i32_109 : i32 to vector<64x128xi32>
    %c1_i32_110 = arith.constant 1 : i32
    %307 = vector.broadcast %c1_i32_110 : i32 to vector<64x128xi32>
    %308 = arith.cmpi eq, %301, %307 : vector<64x128xi32>
    %c4_i32_111 = arith.constant 4 : i32
    %309 = vector.broadcast %c4_i32_111 : i32 to vector<64x128xi32>
    %310 = arith.select %308, %309, %306 : vector<64x128xi1>, vector<64x128xi32>
    %c2_i32_112 = arith.constant 2 : i32
    %311 = vector.broadcast %c2_i32_112 : i32 to vector<64x128xi32>
    %312 = arith.cmpi eq, %301, %311 : vector<64x128xi32>
    %c6_i32_113 = arith.constant 6 : i32
    %313 = vector.broadcast %c6_i32_113 : i32 to vector<64x128xi32>
    %314 = arith.select %312, %313, %310 : vector<64x128xi1>, vector<64x128xi32>
    %c3_i32_114 = arith.constant 3 : i32
    %315 = vector.broadcast %c3_i32_114 : i32 to vector<64x128xi32>
    %316 = arith.cmpi eq, %301, %315 : vector<64x128xi32>
    %c4_i32_115 = arith.constant 4 : i32
    %317 = vector.broadcast %c4_i32_115 : i32 to vector<64x128xi32>
    %318 = arith.select %316, %317, %314 : vector<64x128xi1>, vector<64x128xi32>
    %c4_i32_116 = arith.constant 4 : i32
    %319 = vector.broadcast %c4_i32_116 : i32 to vector<64x128xi32>
    %320 = arith.cmpi eq, %301, %319 : vector<64x128xi32>
    %c1_i32_117 = arith.constant 1 : i32
    %321 = vector.broadcast %c1_i32_117 : i32 to vector<64x128xi32>
    %322 = arith.select %320, %321, %318 : vector<64x128xi1>, vector<64x128xi32>
    %323 = arith.muli %322, %305 : vector<64x128xi32>
    %324 = arith.addi %300, %323 : vector<64x128xi32>
    %325 = arith.subi %301, %305 : vector<64x128xi32>
    %326 = arith.index_cast %1 : i32 to index
    %c12 = arith.constant 12 : index
    %c0_118 = arith.constant 0 : index
    %c0_119 = arith.constant 0 : index
    %327 = vector.load %arg1[%326, %c12, %c0_118, %c0_119] : memref<1x16x64x128xi8, #tpu.memory_space<vmem>>, vector<1x1x64x128xi8>
    %328 = vector.shape_cast %327 : vector<1x1x64x128xi8> to vector<64x128xi8>
    %329 = arith.extsi %328 : vector<64x128xi8> to vector<64x128xi32>
    %c0_i32_120 = arith.constant 0 : i32
    %330 = vector.broadcast %c0_i32_120 : i32 to vector<64x128xi32>
    %c1_i32_121 = arith.constant 1 : i32
    %331 = vector.broadcast %c1_i32_121 : i32 to vector<64x128xi32>
    %332 = arith.cmpi eq, %325, %331 : vector<64x128xi32>
    %c3_i32_122 = arith.constant 3 : i32
    %333 = vector.broadcast %c3_i32_122 : i32 to vector<64x128xi32>
    %334 = arith.select %332, %333, %330 : vector<64x128xi1>, vector<64x128xi32>
    %c2_i32_123 = arith.constant 2 : i32
    %335 = vector.broadcast %c2_i32_123 : i32 to vector<64x128xi32>
    %336 = arith.cmpi eq, %325, %335 : vector<64x128xi32>
    %c3_i32_124 = arith.constant 3 : i32
    %337 = vector.broadcast %c3_i32_124 : i32 to vector<64x128xi32>
    %338 = arith.select %336, %337, %334 : vector<64x128xi1>, vector<64x128xi32>
    %c3_i32_125 = arith.constant 3 : i32
    %339 = vector.broadcast %c3_i32_125 : i32 to vector<64x128xi32>
    %340 = arith.cmpi eq, %325, %339 : vector<64x128xi32>
    %c1_i32_126 = arith.constant 1 : i32
    %341 = vector.broadcast %c1_i32_126 : i32 to vector<64x128xi32>
    %342 = arith.select %340, %341, %338 : vector<64x128xi1>, vector<64x128xi32>
    %343 = arith.muli %342, %329 : vector<64x128xi32>
    %344 = arith.addi %324, %343 : vector<64x128xi32>
    %345 = arith.subi %325, %329 : vector<64x128xi32>
    %346 = arith.index_cast %1 : i32 to index
    %c13 = arith.constant 13 : index
    %c0_127 = arith.constant 0 : index
    %c0_128 = arith.constant 0 : index
    %347 = vector.load %arg1[%346, %c13, %c0_127, %c0_128] : memref<1x16x64x128xi8, #tpu.memory_space<vmem>>, vector<1x1x64x128xi8>
    %348 = vector.shape_cast %347 : vector<1x1x64x128xi8> to vector<64x128xi8>
    %349 = arith.extsi %348 : vector<64x128xi8> to vector<64x128xi32>
    %c0_i32_129 = arith.constant 0 : i32
    %350 = vector.broadcast %c0_i32_129 : i32 to vector<64x128xi32>
    %c1_i32_130 = arith.constant 1 : i32
    %351 = vector.broadcast %c1_i32_130 : i32 to vector<64x128xi32>
    %352 = arith.cmpi eq, %345, %351 : vector<64x128xi32>
    %c2_i32_131 = arith.constant 2 : i32
    %353 = vector.broadcast %c2_i32_131 : i32 to vector<64x128xi32>
    %354 = arith.select %352, %353, %350 : vector<64x128xi1>, vector<64x128xi32>
    %c2_i32_132 = arith.constant 2 : i32
    %355 = vector.broadcast %c2_i32_132 : i32 to vector<64x128xi32>
    %356 = arith.cmpi eq, %345, %355 : vector<64x128xi32>
    %c1_i32_133 = arith.constant 1 : i32
    %357 = vector.broadcast %c1_i32_133 : i32 to vector<64x128xi32>
    %358 = arith.select %356, %357, %354 : vector<64x128xi1>, vector<64x128xi32>
    %359 = arith.muli %358, %349 : vector<64x128xi32>
    %360 = arith.addi %344, %359 : vector<64x128xi32>
    %361 = arith.subi %345, %349 : vector<64x128xi32>
    %362 = arith.index_cast %1 : i32 to index
    %c14 = arith.constant 14 : index
    %c0_134 = arith.constant 0 : index
    %c0_135 = arith.constant 0 : index
    %363 = vector.load %arg1[%362, %c14, %c0_134, %c0_135] : memref<1x16x64x128xi8, #tpu.memory_space<vmem>>, vector<1x1x64x128xi8>
    %364 = vector.shape_cast %363 : vector<1x1x64x128xi8> to vector<64x128xi8>
    %365 = arith.extsi %364 : vector<64x128xi8> to vector<64x128xi32>
    %c0_i32_136 = arith.constant 0 : i32
    %366 = vector.broadcast %c0_i32_136 : i32 to vector<64x128xi32>
    %c1_i32_137 = arith.constant 1 : i32
    %367 = vector.broadcast %c1_i32_137 : i32 to vector<64x128xi32>
    %368 = arith.cmpi eq, %361, %367 : vector<64x128xi32>
    %c1_i32_138 = arith.constant 1 : i32
    %369 = vector.broadcast %c1_i32_138 : i32 to vector<64x128xi32>
    %370 = arith.select %368, %369, %366 : vector<64x128xi1>, vector<64x128xi32>
    %371 = arith.muli %370, %365 : vector<64x128xi32>
    %372 = arith.addi %360, %371 : vector<64x128xi32>
    %373 = arith.index_cast %1 : i32 to index
    %c0_139 = arith.constant 0 : index
    %c0_140 = arith.constant 0 : index
    %374 = vector.load %arg2[%373, %c0_139, %c0_140] : memref<1x64x128xi32, #tpu.memory_space<vmem>>, vector<1x64x128xi32>
    %375 = vector.shape_cast %374 : vector<1x64x128xi32> to vector<64x128xi32>
    %376 = vector.shape_cast %372 : vector<64x128xi32> to vector<1x64x128xi32>
    tpu.vector_store %arg2[%373, %c0_139, %c0_140], %376 {strides = array<i32>} : memref<1x64x128xi32, #tpu.memory_space<vmem>>, vector<1x64x128xi32>,
    %c1_i32_141 = arith.constant 1 : i32
    return
  }
  func.func @transform_0(%arg0: i32) -> (i32, i32, i32, i32) {
    %c0_i32 = arith.constant 0 : i32
    %c0_i32_0 = arith.constant 0 : i32
    %c0_i32_1 = arith.constant 0 : i32
    %c0_i32_2 = arith.constant 0 : i32
    return %arg0, %c0_i32, %c0_i32_0, %c0_i32_1 : i32, i32, i32, i32
  }
  func.func @transform_1(%arg0: i32) -> (i32, i32, i32) {
    %c0_i32 = arith.constant 0 : i32
    %c0_i32_0 = arith.constant 0 : i32
    %c0_i32_1 = arith.constant 0 : i32
    return %arg0, %c0_i32, %c0_i32_0 : i32, i32, i32
  }
}

</mosaic_0001>

<llo_original>
// kernel: tpu_custom_call.1
$region0: #{tpu_custom_call.1}
  #allocation0 [shape = 'u32[]', space=smem, size = 0x4, offset = 0x4, fixed_abs, tag = 'smem constant byte address 0x4 - core index']
  #allocation1 [shape = 'u32[144,128]{1,0:T(1,128)}', space=vmem, size = 0x12000, scoped, tag = 'internal scratch']
  %s0 = inlined_call_operand.hbm [shape: s8[1,16,64,128], index: 0, kind: input, shape index: {}]
  %s1 = inlined_call_operand.hbm [shape: s32[1,64,128], index: 1, kind: output, shape index: {}]
  %s2 = sld [smem:[#allocation0]]
  $region18: #{tpu_custom_call.1} parent=0
    _
  %s4 = ssub.s32 1, %s2
  %s5 = scalar_select 0, %s4, %s2
  $region1: #{tpu_custom_call.1} parent=0
    #allocation2 [shape = 'u8[131072]{0}', space=vmem, size = 0x20000, scoped, tag = 'input window, operand 0, single buffered']
    #allocation3 [shape = 's32[1]{0}', space=sflag, size = 0x4, scoped, tag = 'scoped memory for tpu_custom_call.1']
    #allocation4 [shape = 's32[1]{0}', space=sflag, size = 0x4, scoped, tag = 'scoped memory for tpu_custom_call.1']
    #allocation5 [shape = 'u8[32768]{0}', space=vmem, size = 0x8000, scoped, tag = 'output window, operand 0, single buffered']
    %6 = vsyncpa [#allocation3], 0
    %7 = vsyncpa [#allocation4], 0
    // Predicated region
    $region2: #{tpu_custom_call.1} parent=1 // pred_check
      _
    $region3: #{tpu_custom_call.1} parent=1 // pred_check_branch
      %9 = sbr.rel (0) target = $region5
    $region4: #{tpu_custom_call.1} parent=1 // pred_region
      %s11 = ssub.s32 4096, 4096
      %12 = vsyncadd [#allocation3], %s11
      %s13 = sshll.u32 [#allocation2], 4
      %s14 = int_to_ptr.vmem [resolvable:$true] %s13
      %19 = dma.hbm_to_vmem [thread:$0]  %s0, 4096, %s14, [#allocation3], 128, 128, 8
    $region5: #{tpu_custom_call.1} parent=1 // pred_fallthru
      _
    // Predicated region
    $region6: #{tpu_custom_call.1} parent=1 // pred_check
      _
    $region7: #{tpu_custom_call.1} parent=1 // pred_check_branch
      %21 = sbr.rel (0) target = $region9
    $region8: #{tpu_custom_call.1} parent=1 // pred_region
      %22 = dma.done [#allocation3], 4096
    $region9: #{tpu_custom_call.1} parent=1 // pred_fallthru
      _
    %v23 = vld [vmem:[#allocation2] sm:$0xff]
    %v24 = vld [vmem:[#allocation2 + $0x8] sm:$0xff]
    %v25 = vunpack.c.0.s8 %v23
    %v26 = vunpack.c.1.s8 %v23
    %v27 = vunpack.c.2.s8 %v23
    %v28 = vunpack.c.3.s8 %v23
    %v29 = vunpack.c.0.s8 %v24
    %v30 = vunpack.c.1.s8 %v24
    %v31 = vunpack.c.2.s8 %v24
    %v32 = vunpack.c.3.s8 %v24
    %v33 = vmul.u32 %v25, 6435
    %v34 = vmul.u32 %v26, 6435
    %v35 = vmul.u32 %v27, 6435
    %v36 = vmul.u32 %v28, 6435
    %v37 = vmul.u32 %v29, 6435
    %v38 = vmul.u32 %v30, 6435
    %v39 = vmul.u32 %v31, 6435
    %v40 = vmul.u32 %v32, 6435
    %v41 = vsub.s32 8, %v25
    %v42 = vsub.s32 8, %v26
    %v43 = vsub.s32 8, %v27
    %v44 = vsub.s32 8, %v28
    %v45 = vsub.s32 8, %v29
    %v46 = vsub.s32 8, %v30
    %v47 = vsub.s32 8, %v31
    %v48 = vsub.s32 8, %v32
    %s49 = scalar_lea.vmem [#allocation2], 16
    %v50 = vld [vmem:[%s49] sm:$0xff]
    %v51 = vld [vmem:[%s49 + $0x8] sm:$0xff]
    %v52 = vunpack.c.0.s8 %v50
    %v53 = vunpack.c.1.s8 %v50
    %v54 = vunpack.c.2.s8 %v50
    %v55 = vunpack.c.3.s8 %v50
    %v56 = vunpack.c.0.s8 %v51
    %v57 = vunpack.c.1.s8 %v51
    %v58 = vunpack.c.2.s8 %v51
    %v59 = vunpack.c.3.s8 %v51
    %vm60 = vcmp.eq.s32.totalorder %v41, 7
    %vm61 = vcmp.eq.s32.totalorder %v42, 7
    %vm62 = vcmp.eq.s32.totalorder %v43, 7
    %vm63 = vcmp.eq.s32.totalorder %v44, 7
    %vm64 = vcmp.eq.s32.totalorder %v45, 7
    %vm65 = vcmp.eq.s32.totalorder %v46, 7
    %vm66 = vcmp.eq.s32.totalorder %v47, 7
    %vm67 = vcmp.eq.s32.totalorder %v48, 7
    %v68 = vsel %vm60, 3432, 0
    %v69 = vsel %vm61, 3432, 0
    %v70 = vsel %vm62, 3432, 0
    %v71 = vsel %vm63, 3432, 0
    %v72 = vsel %vm64, 3432, 0
    %v73 = vsel %vm65, 3432, 0
    %v74 = vsel %vm66, 3432, 0
    %v75 = vsel %vm67, 3432, 0
    %vm76 = vcmp.eq.s32.totalorder %v41, 8
    %vm77 = vcmp.eq.s32.totalorder %v42, 8
    %vm78 = vcmp.eq.s32.totalorder %v43, 8
    %vm79 = vcmp.eq.s32.totalorder %v44, 8
    %vm80 = vcmp.eq.s32.totalorder %v45, 8
    %vm81 = vcmp.eq.s32.totalorder %v46, 8
    %vm82 = vcmp.eq.s32.totalorder %v47, 8
    %vm83 = vcmp.eq.s32.totalorder %v48, 8
    %v84 = vsel %vm76, 3003, %v68
    %v85 = vsel %vm77, 3003, %v69
    %v86 = vsel %vm78, 3003, %v70
    %v87 = vsel %vm79, 3003, %v71
    %v88 = vsel %vm80, 3003, %v72
    %v89 = vsel %vm81, 3003, %v73
    %v90 = vsel %vm82, 3003, %v74
    %v91 = vsel %vm83, 3003, %v75
    %v92 = vmul.u32 %v84, %v52
    %v93 = vmul.u32 %v85, %v53
    %v94 = vmul.u32 %v86, %v54
    %v95 = vmul.u32 %v87, %v55
    %v96 = vmul.u32 %v88, %v56
    %v97 = vmul.u32 %v89, %v57
    %v98 = vmul.u32 %v90, %v58
    %v99 = vmul.u32 %v91, %v59
    %v100 = vadd.s32 %v33, %v92
    %v101 = vadd.s32 %v34, %v93
    %v102 = vadd.s32 %v35, %v94
    %v103 = vadd.s32 %v36, %v95
    %v104 = vadd.s32 %v37, %v96
    %v105 = vadd.s32 %v38, %v97
    %v106 = vadd.s32 %v39, %v98
    %v107 = vadd.s32 %v40, %v99
    %v108 = vsub.s32 %v41, %v52
    %v109 = vsub.s32 %v42, %v53
    %v110 = vsub.s32 %v43, %v54
    %v111 = vsub.s32 %v44, %v55
    %v112 = vsub.s32 %v45, %v56
    %v113 = vsub.s32 %v46, %v57
    %v114 = vsub.s32 %v47, %v58
    %v115 = vsub.s32 %v48, %v59
    %s116 = scalar_lea.vmem [#allocation2], 32
    %v117 = vld [vmem:[%s116] sm:$0xff]
    %v118 = vld [vmem:[%s116 + $0x8] sm:$0xff]
    %v119 = vunpack.c.0.s8 %v117
    %v120 = vunpack.c.1.s8 %v117
    %v121 = vunpack.c.2.s8 %v117
    %v122 = vunpack.c.3.s8 %v117
    %v123 = vunpack.c.0.s8 %v118
    %v124 = vunpack.c.1.s8 %v118
    %v125 = vunpack.c.2.s8 %v118
    %v126 = vunpack.c.3.s8 %v118
    %vm127 = vcmp.eq.s32.totalorder %v108, 6
    %vm128 = vcmp.eq.s32.totalorder %v109, 6
    %vm129 = vcmp.eq.s32.totalorder %v110, 6
    %vm130 = vcmp.eq.s32.totalorder %v111, 6
    %vm131 = vcmp.eq.s32.totalorder %v112, 6
    %vm132 = vcmp.eq.s32.totalorder %v113, 6
    %vm133 = vcmp.eq.s32.totalorder %v114, 6
    %vm134 = vcmp.eq.s32.totalorder %v115, 6
    %v135 = vsel %vm127, 1716, 0
    %v136 = vsel %vm128, 1716, 0
    %v137 = vsel %vm129, 1716, 0
    %v138 = vsel %vm130, 1716, 0
    %v139 = vsel %vm131, 1716, 0
    %v140 = vsel %vm132, 1716, 0
    %v141 = vsel %vm133, 1716, 0
    %v142 = vsel %vm134, 1716, 0
    %vm143 = vcmp.eq.s32.totalorder %v108, 7
    %vm144 = vcmp.eq.s32.totalorder %v109, 7
    %vm145 = vcmp.eq.s32.totalorder %v110, 7
    %vm146 = vcmp.eq.s32.totalorder %v111, 7
    %vm147 = vcmp.eq.s32.totalorder %v112, 7
    %vm148 = vcmp.eq.s32.totalorder %v113, 7
    %vm149 = vcmp.eq.s32.totalorder %v114, 7
    %vm150 = vcmp.eq.s32.totalorder %v115, 7
    %v151 = vsel %vm143, 1716, %v135
    %v152 = vsel %vm144, 1716, %v136
    %v153 = vsel %vm145, 1716, %v137
    %v154 = vsel %vm146, 1716, %v138
    %v155 = vsel %vm147, 1716, %v139
    %v156 = vsel %vm148, 1716, %v140
    %v157 = vsel %vm149, 1716, %v141
    %v158 = vsel %vm150, 1716, %v142
    %vm159 = vcmp.eq.s32.totalorder %v108, 8
    %vm160 = vcmp.eq.s32.totalorder %v109, 8
    %vm161 = vcmp.eq.s32.totalorder %v110, 8
    %vm162 = vcmp.eq.s32.totalorder %v111, 8
    %vm163 = vcmp.eq.s32.totalorder %v112, 8
    %vm164 = vcmp.eq.s32.totalorder %v113, 8
    %vm165 = vcmp.eq.s32.totalorder %v114, 8
    %vm166 = vcmp.eq.s32.totalorder %v115, 8
    %v167 = vsel %vm159, 1287, %v151
    %v168 = vsel %vm160, 1287, %v152
    %v169 = vsel %vm161, 1287, %v153
    %v170 = vsel %vm162, 1287, %v154
    %v171 = vsel %vm163, 1287, %v155
    %v172 = vsel %vm164, 1287, %v156
    %v173 = vsel %vm165, 1287, %v157
    %v174 = vsel %vm166, 1287, %v158
    %v175 = vmul.u32 %v167, %v119
    %v176 = vmul.u32 %v168, %v120
    %v177 = vmul.u32 %v169, %v121
    %v178 = vmul.u32 %v170, %v122
    %v179 = vmul.u32 %v171, %v123
    %v180 = vmul.u32 %v172, %v124
    %v181 = vmul.u32 %v173, %v125
    %v182 = vmul.u32 %v174, %v126
    %v183 = vadd.s32 %v100, %v175
    %v184 = vadd.s32 %v101, %v176
    %v185 = vadd.s32 %v102, %v177
    %v186 = vadd.s32 %v103, %v178
    %v187 = vadd.s32 %v104, %v179
    %v188 = vadd.s32 %v105, %v180
    %v189 = vadd.s32 %v106, %v181
    %v190 = vadd.s32 %v107, %v182
    %v191 = vsub.s32 %v108, %v119
    %v192 = vsub.s32 %v109, %v120
    %v193 = vsub.s32 %v110, %v121
    %v194 = vsub.s32 %v111, %v122
    %v195 = vsub.s32 %v112, %v123
    %v196 = vsub.s32 %v113, %v124
    %v197 = vsub.s32 %v114, %v125
    %v198 = vsub.s32 %v115, %v126
    %s199 = scalar_lea.vmem [#allocation2], 48
    %v200 = vld [vmem:[%s199] sm:$0xff]
    %v201 = vld [vmem:[%s199 + $0x8] sm:$0xff]
    %v202 = vunpack.c.0.s8 %v200
    %v203 = vunpack.c.1.s8 %v200
    %v204 = vunpack.c.2.s8 %v200
    %v205 = vunpack.c.3.s8 %v200
    %v206 = vunpack.c.0.s8 %v201
    %v207 = vunpack.c.1.s8 %v201
    %v208 = vunpack.c.2.s8 %v201
    %v209 = vunpack.c.3.s8 %v201
    %vm210 = vcmp.eq.s32.totalorder %v191, 5
    %vm211 = vcmp.eq.s32.totalorder %v192, 5
    %vm212 = vcmp.eq.s32.totalorder %v193, 5
    %vm213 = vcmp.eq.s32.totalorder %v194, 5
    %vm214 = vcmp.eq.s32.totalorder %v195, 5
    %vm215 = vcmp.eq.s32.totalorder %v196, 5
    %vm216 = vcmp.eq.s32.totalorder %v197, 5
    %vm217 = vcmp.eq.s32.totalorder %v198, 5
    %v218 = vsel %vm210, 792, 0
    %v219 = vsel %vm211, 792, 0
    %v220 = vsel %vm212, 792, 0
    %v221 = vsel %vm213, 792, 0
    %v222 = vsel %vm214, 792, 0
    %v223 = vsel %vm215, 792, 0
    %v224 = vsel %vm216, 792, 0
    %v225 = vsel %vm217, 792, 0
    %vm226 = vcmp.eq.s32.totalorder %v191, 6
    %vm227 = vcmp.eq.s32.totalorder %v192, 6
    %vm228 = vcmp.eq.s32.totalorder %v193, 6
    %vm229 = vcmp.eq.s32.totalorder %v194, 6
    %vm230 = vcmp.eq.s32.totalorder %v195, 6
    %vm231 = vcmp.eq.s32.totalorder %v196, 6
    %vm232 = vcmp.eq.s32.totalorder %v197, 6
    %vm233 = vcmp.eq.s32.totalorder %v198, 6
    %v234 = vsel %vm226, 924, %v218
    %v235 = vsel %vm227, 924, %v219
    %v236 = vsel %vm228, 924, %v220
    %v237 = vsel %vm229, 924, %v221
    %v238 = vsel %vm230, 924, %v222
    %v239 = vsel %vm231, 924, %v223
    %v240 = vsel %vm232, 924, %v224
    %v241 = vsel %vm233, 924, %v225
    %vm242 = vcmp.eq.s32.totalorder %v191, 7
    %vm243 = vcmp.eq.s32.totalorder %v192, 7
    %vm244 = vcmp.eq.s32.totalorder %v193, 7
    %vm245 = vcmp.eq.s32.totalorder %v194, 7
    %vm246 = vcmp.eq.s32.totalorder %v195, 7
    %vm247 = vcmp.eq.s32.totalorder %v196, 7
    %vm248 = vcmp.eq.s32.totalorder %v197, 7
    %vm249 = vcmp.eq.s32.totalorder %v198, 7
    %v250 = vsel %vm242, 792, %v234
    %v251 = vsel %vm243, 792, %v235
    %v252 = vsel %vm244, 792, %v236
    %v253 = vsel %vm245, 792, %v237
    %v254 = vsel %vm246, 792, %v238
    %v255 = vsel %vm247, 792, %v239
    %v256 = vsel %vm248, 792, %v240
    %v257 = vsel %vm249, 792, %v241
    %vm258 = vcmp.eq.s32.totalorder %v191, 8
    %vm259 = vcmp.eq.s32.totalorder %v192, 8
    %vm260 = vcmp.eq.s32.totalorder %v193, 8
    %vm261 = vcmp.eq.s32.totalorder %v194, 8
    %vm262 = vcmp.eq.s32.totalorder %v195, 8
    %vm263 = vcmp.eq.s32.totalorder %v196, 8
    %vm264 = vcmp.eq.s32.totalorder %v197, 8
    %vm265 = vcmp.eq.s32.totalorder %v198, 8
    %v266 = vsel %vm258, 495, %v250
    %v267 = vsel %vm259, 495, %v251
    %v268 = vsel %vm260, 495, %v252
    %v269 = vsel %vm261, 495, %v253
    %v270 = vsel %vm262, 495, %v254
    %v271 = vsel %vm263, 495, %v255
    %v272 = vsel %vm264, 495, %v256
    %v273 = vsel %vm265, 495, %v257
    %v274 = vmul.u32 %v266, %v202
    %v275 = vmul.u32 %v267, %v203
    %v276 = vmul.u32 %v268, %v204
    %v277 = vmul.u32 %v269, %v205
    %v278 = vmul.u32 %v270, %v206
    %v279 = vmul.u32 %v271, %v207
    %v280 = vmul.u32 %v272, %v208
    %v281 = vmul.u32 %v273, %v209
    %v282 = vadd.s32 %v183, %v274
    %v283 = vadd.s32 %v184, %v275
    %v284 = vadd.s32 %v185, %v276
    %v285 = vadd.s32 %v186, %v277
    %v286 = vadd.s32 %v187, %v278
    %v287 = vadd.s32 %v188, %v279
    %v288 = vadd.s32 %v189, %v280
    %v289 = vadd.s32 %v190, %v281
    %v290 = vsub.s32 %v191, %v202
    %v291 = vsub.s32 %v192, %v203
    %v292 = vsub.s32 %v193, %v204
    %v293 = vsub.s32 %v194, %v205
    %v294 = vsub.s32 %v195, %v206
    %v295 = vsub.s32 %v196, %v207
    %v296 = vsub.s32 %v197, %v208
    %v297 = vsub.s32 %v198, %v209
    %s298 = scalar_lea.vmem [#allocation2], 64
    %v299 = vld [vmem:[%s298] sm:$0xff]
    %v300 = vld [vmem:[%s298 + $0x8] sm:$0xff]
    %v301 = vunpack.c.0.s8 %v299
    %v302 = vunpack.c.1.s8 %v299
    %v303 = vunpack.c.2.s8 %v299
    %v304 = vunpack.c.3.s8 %v299
    %v305 = vunpack.c.0.s8 %v300
    %v306 = vunpack.c.1.s8 %v300
    %v307 = vunpack.c.2.s8 %v300
    %v308 = vunpack.c.3.s8 %v300
    %vm309 = vcmp.eq.s32.totalorder %v290, 4
    %vm310 = vcmp.eq.s32.totalorder %v291, 4
    %vm311 = vcmp.eq.s32.totalorder %v292, 4
    %vm312 = vcmp.eq.s32.totalorder %v293, 4
    %vm313 = vcmp.eq.s32.totalorder %v294, 4
    %vm314 = vcmp.eq.s32.totalorder %v295, 4
    %vm315 = vcmp.eq.s32.totalorder %v296, 4
    %vm316 = vcmp.eq.s32.totalorder %v297, 4
    %v317 = vsel %vm309, 330, 0
    %v318 = vsel %vm310, 330, 0
    %v319 = vsel %vm311, 330, 0
    %v320 = vsel %vm312, 330, 0
    %v321 = vsel %vm313, 330, 0
    %v322 = vsel %vm314, 330, 0
    %v323 = vsel %vm315, 330, 0
    %v324 = vsel %vm316, 330, 0
    %vm325 = vcmp.eq.s32.totalorder %v290, 5
    %vm326 = vcmp.eq.s32.totalorder %v291, 5
    %vm327 = vcmp.eq.s32.totalorder %v292, 5
    %vm328 = vcmp.eq.s32.totalorder %v293, 5
    %vm329 = vcmp.eq.s32.totalorder %v294, 5
    %vm330 = vcmp.eq.s32.totalorder %v295, 5
    %vm331 = vcmp.eq.s32.totalorder %v296, 5
    %vm332 = vcmp.eq.s32.totalorder %v297, 5
    %v333 = vsel %vm325, 462, %v317
    %v334 = vsel %vm326, 462, %v318
    %v335 = vsel %vm327, 462, %v319
    %v336 = vsel %vm328, 462, %v320
    %v337 = vsel %vm329, 462, %v321
    %v338 = vsel %vm330, 462, %v322
    %v339 = vsel %vm331, 462, %v323
    %v340 = vsel %vm332, 462, %v324
    %vm341 = vcmp.eq.s32.totalorder %v290, 6
    %vm342 = vcmp.eq.s32.totalorder %v291, 6
    %vm343 = vcmp.eq.s32.totalorder %v292, 6
    %vm344 = vcmp.eq.s32.totalorder %v293, 6
    %vm345 = vcmp.eq.s32.totalorder %v294, 6
    %vm346 = vcmp.eq.s32.totalorder %v295, 6
    %vm347 = vcmp.eq.s32.totalorder %v296, 6
    %vm348 = vcmp.eq.s32.totalorder %v297, 6
    %v349 = vsel %vm341, 462, %v333
    %v350 = vsel %vm342, 462, %v334
    %v351 = vsel %vm343, 462, %v335
    %v352 = vsel %vm344, 462, %v336
    %v353 = vsel %vm345, 462, %v337
    %v354 = vsel %vm346, 462, %v338
    %v355 = vsel %vm347, 462, %v339
    %v356 = vsel %vm348, 462, %v340
    %vm357 = vcmp.eq.s32.totalorder %v290, 7
    %vm358 = vcmp.eq.s32.totalorder %v291, 7
    %vm359 = vcmp.eq.s32.totalorder %v292, 7
    %vm360 = vcmp.eq.s32.totalorder %v293, 7
    %vm361 = vcmp.eq.s32.totalorder %v294, 7
    %vm362 = vcmp.eq.s32.totalorder %v295, 7
    %vm363 = vcmp.eq.s32.totalorder %v296, 7
    %vm364 = vcmp.eq.s32.totalorder %v297, 7
    %v365 = vsel %vm357, 330, %v349
    %v366 = vsel %vm358, 330, %v350
    %v367 = vsel %vm359, 330, %v351
    %v368 = vsel %vm360, 330, %v352
    %v369 = vsel %vm361, 330, %v353
    %v370 = vsel %vm362, 330, %v354
    %v371 = vsel %vm363, 330, %v355
    %v372 = vsel %vm364, 330, %v356
    %vm373 = vcmp.eq.s32.totalorder %v290, 8
    %vm374 = vcmp.eq.s32.totalorder %v291, 8
    %vm375 = vcmp.eq.s32.totalorder %v292, 8
    %vm376 = vcmp.eq.s32.totalorder %v293, 8
    %vm377 = vcmp.eq.s32.totalorder %v294, 8
    %vm378 = vcmp.eq.s32.totalorder %v295, 8
    %vm379 = vcmp.eq.s32.totalorder %v296, 8
    %vm380 = vcmp.eq.s32.totalorder %v297, 8
    %v381 = vsel %vm373, 165, %v365
    %v382 = vsel %vm374, 165, %v366
    %v383 = vsel %vm375, 165, %v367
    %v384 = vsel %vm376, 165, %v368
    %v385 = vsel %vm377, 165, %v369
    %v386 = vsel %vm378, 165, %v370
    %v387 = vsel %vm379, 165, %v371
    %v388 = vsel %vm380, 165, %v372
    %v389 = vmul.u32 %v381, %v301
    %v390 = vmul.u32 %v382, %v302
    %v391 = vmul.u32 %v383, %v303
    %v392 = vmul.u32 %v384, %v304
    %v393 = vmul.u32 %v385, %v305
    %v394 = vmul.u32 %v386, %v306
    %v395 = vmul.u32 %v387, %v307
    %v396 = vmul.u32 %v388, %v308
    %v397 = vadd.s32 %v282, %v389
    %v398 = vadd.s32 %v283, %v390
    %v399 = vadd.s32 %v284, %v391
    %v400 = vadd.s32 %v285, %v392
    %v401 = vadd.s32 %v286, %v393
    %v402 = vadd.s32 %v287, %v394
    %v403 = vadd.s32 %v288, %v395
    %v404 = vadd.s32 %v289, %v396
    %v405 = vsub.s32 %v290, %v301
    %v406 = vsub.s32 %v291, %v302
    %v407 = vsub.s32 %v292, %v303
    %v408 = vsub.s32 %v293, %v304
    %v409 = vsub.s32 %v294, %v305
    %v410 = vsub.s32 %v295, %v306
    %v411 = vsub.s32 %v296, %v307
    %v412 = vsub.s32 %v297, %v308
    %s413 = scalar_lea.vmem [#allocation2], 80
    %v414 = vld [vmem:[%s413] sm:$0xff]
    %v415 = vld [vmem:[%s413 + $0x8] sm:$0xff]
    %v416 = vunpack.c.0.s8 %v414
    %v417 = vunpack.c.1.s8 %v414
    %v418 = vunpack.c.2.s8 %v414
    %v419 = vunpack.c.3.s8 %v414
    %v420 = vunpack.c.0.s8 %v415
    %v421 = vunpack.c.1.s8 %v415
    %v422 = vunpack.c.2.s8 %v415
    %v423 = vunpack.c.3.s8 %v415
    %vm424 = vcmp.eq.s32.totalorder %v405, 3
    %vm425 = vcmp.eq.s32.totalorder %v406, 3
    %vm426 = vcmp.eq.s32.totalorder %v407, 3
    %vm427 = vcmp.eq.s32.totalorder %v408, 3
    %vm428 = vcmp.eq.s32.totalorder %v409, 3
    %vm429 = vcmp.eq.s32.totalorder %v410, 3
    %vm430 = vcmp.eq.s32.totalorder %v411, 3
    %vm431 = vcmp.eq.s32.totalorder %v412, 3
    %v432 = vsel %vm424, 120, 0
    %v433 = vsel %vm425, 120, 0
    %v434 = vsel %vm426, 120, 0
    %v435 = vsel %vm427, 120, 0
    %v436 = vsel %vm428, 120, 0
    %v437 = vsel %vm429, 120, 0
    %v438 = vsel %vm430, 120, 0
    %v439 = vsel %vm431, 120, 0
    %vm440 = vcmp.eq.s32.totalorder %v405, 4
    %vm441 = vcmp.eq.s32.totalorder %v406, 4
    %vm442 = vcmp.eq.s32.totalorder %v407, 4
    %vm443 = vcmp.eq.s32.totalorder %v408, 4
    %vm444 = vcmp.eq.s32.totalorder %v409, 4
    %vm445 = vcmp.eq.s32.totalorder %v410, 4
    %vm446 = vcmp.eq.s32.totalorder %v411, 4
    %vm447 = vcmp.eq.s32.totalorder %v412, 4
    %v448 = vsel %vm440, 210, %v432
    %v449 = vsel %vm441, 210, %v433
    %v450 = vsel %vm442, 210, %v434
    %v451 = vsel %vm443, 210, %v435
    %v452 = vsel %vm444, 210, %v436
    %v453 = vsel %vm445, 210, %v437
    %v454 = vsel %vm446, 210, %v438
    %v455 = vsel %vm447, 210, %v439
    %vm456 = vcmp.eq.s32.totalorder %v405, 5
    %vm457 = vcmp.eq.s32.totalorder %v406, 5
    %vm458 = vcmp.eq.s32.totalorder %v407, 5
    %vm459 = vcmp.eq.s32.totalorder %v408, 5
    %vm460 = vcmp.eq.s32.totalorder %v409, 5
    %vm461 = vcmp.eq.s32.totalorder %v410, 5
    %vm462 = vcmp.eq.s32.totalorder %v411, 5
    %vm463 = vcmp.eq.s32.totalorder %v412, 5
    %v464 = vsel %vm456, 252, %v448
    %v465 = vsel %vm457, 252, %v449
    %v466 = vsel %vm458, 252, %v450
    %v467 = vsel %vm459, 252, %v451
    %v468 = vsel %vm460, 252, %v452
    %v469 = vsel %vm461, 252, %v453
    %v470 = vsel %vm462, 252, %v454
    %v471 = vsel %vm463, 252, %v455
    %vm472 = vcmp.eq.s32.totalorder %v405, 6
    %vm473 = vcmp.eq.s32.totalorder %v406, 6
    %vm474 = vcmp.eq.s32.totalorder %v407, 6
    %vm475 = vcmp.eq.s32.totalorder %v408, 6
    %vm476 = vcmp.eq.s32.totalorder %v409, 6
    %vm477 = vcmp.eq.s32.totalorder %v410, 6
    %vm478 = vcmp.eq.s32.totalorder %v411, 6
    %vm479 = vcmp.eq.s32.totalorder %v412, 6
    %v480 = vsel %vm472, 210, %v464
    %v481 = vsel %vm473, 210, %v465
    %v482 = vsel %vm474, 210, %v466
    %v483 = vsel %vm475, 210, %v467
    %v484 = vsel %vm476, 210, %v468
    %v485 = vsel %vm477, 210, %v469
    %v486 = vsel %vm478, 210, %v470
    %v487 = vsel %vm479, 210, %v471
    %vm488 = vcmp.eq.s32.totalorder %v405, 7
    %vm489 = vcmp.eq.s32.totalorder %v406, 7
    %vm490 = vcmp.eq.s32.totalorder %v407, 7
    %vm491 = vcmp.eq.s32.totalorder %v408, 7
    %vm492 = vcmp.eq.s32.totalorder %v409, 7
    %vm493 = vcmp.eq.s32.totalorder %v410, 7
    %vm494 = vcmp.eq.s32.totalorder %v411, 7
    %vm495 = vcmp.eq.s32.totalorder %v412, 7
    %v496 = vsel %vm488, 120, %v480
    %v497 = vsel %vm489, 120, %v481
    %v498 = vsel %vm490, 120, %v482
    %v499 = vsel %vm491, 120, %v483
    %v500 = vsel %vm492, 120, %v484
    %v501 = vsel %vm493, 120, %v485
    %v502 = vsel %vm494, 120, %v486
    %v503 = vsel %vm495, 120, %v487
    %vm504 = vcmp.eq.s32.totalorder %v405, 8
    %vm505 = vcmp.eq.s32.totalorder %v406, 8
    %vm506 = vcmp.eq.s32.totalorder %v407, 8
    %vm507 = vcmp.eq.s32.totalorder %v408, 8
    %vm508 = vcmp.eq.s32.totalorder %v409, 8
    %vm509 = vcmp.eq.s32.totalorder %v410, 8
    %vm510 = vcmp.eq.s32.totalorder %v411, 8
    %vm511 = vcmp.eq.s32.totalorder %v412, 8
    %v512 = vsel %vm504, 45, %v496
    %v513 = vsel %vm505, 45, %v497
    %v514 = vsel %vm506, 45, %v498
    %v515 = vsel %vm507, 45, %v499
    %v516 = vsel %vm508, 45, %v500
    %v517 = vsel %vm509, 45, %v501
    %v518 = vsel %vm510, 45, %v502
    %v519 = vsel %vm511, 45, %v503
    %v520 = vmul.u32 %v512, %v416
    %v521 = vmul.u32 %v513, %v417
    %v522 = vmul.u32 %v514, %v418
    %v523 = vmul.u32 %v515, %v419
    %v524 = vmul.u32 %v516, %v420
    %v525 = vmul.u32 %v517, %v421
    %v526 = vmul.u32 %v518, %v422
    %v527 = vmul.u32 %v519, %v423
    %v528 = vadd.s32 %v397, %v520
    %v529 = vadd.s32 %v398, %v521
    %v530 = vadd.s32 %v399, %v522
    %v531 = vadd.s32 %v400, %v523
    %v532 = vadd.s32 %v401, %v524
    %v533 = vadd.s32 %v402, %v525
    %v534 = vadd.s32 %v403, %v526
    %v535 = vadd.s32 %v404, %v527
    %v536 = vsub.s32 %v405, %v416
    %v537 = vsub.s32 %v406, %v417
    %v538 = vsub.s32 %v407, %v418
    %v539 = vsub.s32 %v408, %v419
    %v540 = vsub.s32 %v409, %v420
    %v541 = vsub.s32 %v410, %v421
    %v542 = vsub.s32 %v411, %v422
    %v543 = vsub.s32 %v412, %v423
    %s544 = scalar_lea.vmem [#allocation2], 96
    %v545 = vld [vmem:[%s544] sm:$0xff]
    %v546 = vld [vmem:[%s544 + $0x8] sm:$0xff]
    %v547 = vunpack.c.0.s8 %v545
    %v548 = vunpack.c.1.s8 %v545
    %v549 = vunpack.c.2.s8 %v545
    %v550 = vunpack.c.3.s8 %v545
    %v551 = vunpack.c.0.s8 %v546
    %v552 = vunpack.c.1.s8 %v546
    %v553 = vunpack.c.2.s8 %v546
    %v554 = vunpack.c.3.s8 %v546
    %vm555 = vcmp.eq.s32.totalorder %v536, 2
    %vm556 = vcmp.eq.s32.totalorder %v537, 2
    %vm557 = vcmp.eq.s32.totalorder %v538, 2
    %vm558 = vcmp.eq.s32.totalorder %v539, 2
    %vm559 = vcmp.eq.s32.totalorder %v540, 2
    %vm560 = vcmp.eq.s32.totalorder %v541, 2
    %vm561 = vcmp.eq.s32.totalorder %v542, 2
    %vm562 = vcmp.eq.s32.totalorder %v543, 2
    %v563 = vsel %vm555, 36, 0
    %v564 = vsel %vm556, 36, 0
    %v565 = vsel %vm557, 36, 0
    %v566 = vsel %vm558, 36, 0
    %v567 = vsel %vm559, 36, 0
    %v568 = vsel %vm560, 36, 0
    %v569 = vsel %vm561, 36, 0
    %v570 = vsel %vm562, 36, 0
    %vm571 = vcmp.eq.s32.totalorder %v536, 3
    %vm572 = vcmp.eq.s32.totalorder %v537, 3
    %vm573 = vcmp.eq.s32.totalorder %v538, 3
    %vm574 = vcmp.eq.s32.totalorder %v539, 3
    %vm575 = vcmp.eq.s32.totalorder %v540, 3
    %vm576 = vcmp.eq.s32.totalorder %v541, 3
    %vm577 = vcmp.eq.s32.totalorder %v542, 3
    %vm578 = vcmp.eq.s32.totalorder %v543, 3
    %v579 = vsel %vm571, 84, %v563
    %v580 = vsel %vm572, 84, %v564
    %v581 = vsel %vm573, 84, %v565
    %v582 = vsel %vm574, 84, %v566
    %v583 = vsel %vm575, 84, %v567
    %v584 = vsel %vm576, 84, %v568
    %v585 = vsel %vm577, 84, %v569
    %v586 = vsel %vm578, 84, %v570
    %vm587 = vcmp.eq.s32.totalorder %v536, 4
    %vm588 = vcmp.eq.s32.totalorder %v537, 4
    %vm589 = vcmp.eq.s32.totalorder %v538, 4
    %vm590 = vcmp.eq.s32.totalorder %v539, 4
    %vm591 = vcmp.eq.s32.totalorder %v540, 4
    %vm592 = vcmp.eq.s32.totalorder %v541, 4
    %vm593 = vcmp.eq.s32.totalorder %v542, 4
    %vm594 = vcmp.eq.s32.totalorder %v543, 4
    %v595 = vsel %vm587, 126, %v579
    %v596 = vsel %vm588, 126, %v580
    %v597 = vsel %vm589, 126, %v581
    %v598 = vsel %vm590, 126, %v582
    %v599 = vsel %vm591, 126, %v583
    %v600 = vsel %vm592, 126, %v584
    %v601 = vsel %vm593, 126, %v585
    %v602 = vsel %vm594, 126, %v586
    %vm603 = vcmp.eq.s32.totalorder %v536, 5
    %vm604 = vcmp.eq.s32.totalorder %v537, 5
    %vm605 = vcmp.eq.s32.totalorder %v538, 5
    %vm606 = vcmp.eq.s32.totalorder %v539, 5
    %vm607 = vcmp.eq.s32.totalorder %v540, 5
    %vm608 = vcmp.eq.s32.totalorder %v541, 5
    %vm609 = vcmp.eq.s32.totalorder %v542, 5
    %vm610 = vcmp.eq.s32.totalorder %v543, 5
    %v611 = vsel %vm603, 126, %v595
    %v612 = vsel %vm604, 126, %v596
    %v613 = vsel %vm605, 126, %v597
    %v614 = vsel %vm606, 126, %v598
    %v615 = vsel %vm607, 126, %v599
    %v616 = vsel %vm608, 126, %v600
    %v617 = vsel %vm609, 126, %v601
    %v618 = vsel %vm610, 126, %v602
    %vm619 = vcmp.eq.s32.totalorder %v536, 6
    %vm620 = vcmp.eq.s32.totalorder %v537, 6
    %vm621 = vcmp.eq.s32.totalorder %v538, 6
    %vm622 = vcmp.eq.s32.totalorder %v539, 6
    %vm623 = vcmp.eq.s32.totalorder %v540, 6
    %vm624 = vcmp.eq.s32.totalorder %v541, 6
    %vm625 = vcmp.eq.s32.totalorder %v542, 6
    %vm626 = vcmp.eq.s32.totalorder %v543, 6
    %v627 = vsel %vm619, 84, %v611
    %v628 = vsel %vm620, 84, %v612
    %v629 = vsel %vm621, 84, %v613
    %v630 = vsel %vm622, 84, %v614
    %v631 = vsel %vm623, 84, %v615
    %v632 = vsel %vm624, 84, %v616
    %v633 = vsel %vm625, 84, %v617
    %v634 = vsel %vm626, 84, %v618
    %vm635 = vcmp.eq.s32.totalorder %v536, 7
    %vm636 = vcmp.eq.s32.totalorder %v537, 7
    %vm637 = vcmp.eq.s32.totalorder %v538, 7
    %vm638 = vcmp.eq.s32.totalorder %v539, 7
    %vm639 = vcmp.eq.s32.totalorder %v540, 7
    %vm640 = vcmp.eq.s32.totalorder %v541, 7
    %vm641 = vcmp.eq.s32.totalorder %v542, 7
    %vm642 = vcmp.eq.s32.totalorder %v543, 7
    %v643 = vsel %vm635, 36, %v627
    %v644 = vsel %vm636, 36, %v628
    %v645 = vsel %vm637, 36, %v629
    %v646 = vsel %vm638, 36, %v630
    %v647 = vsel %vm639, 36, %v631
    %v648 = vsel %vm640, 36, %v632
    %v649 = vsel %vm641, 36, %v633
    %v650 = vsel %vm642, 36, %v634
    %vm651 = vcmp.eq.s32.totalorder %v536, 8
    %vm652 = vcmp.eq.s32.totalorder %v537, 8
    %vm653 = vcmp.eq.s32.totalorder %v538, 8
    %vm654 = vcmp.eq.s32.totalorder %v539, 8
    %vm655 = vcmp.eq.s32.totalorder %v540, 8
    %vm656 = vcmp.eq.s32.totalorder %v541, 8
    %vm657 = vcmp.eq.s32.totalorder %v542, 8
    %vm658 = vcmp.eq.s32.totalorder %v543, 8
    %v659 = vsel %vm651, 9, %v643
    %v660 = vsel %vm652, 9, %v644
    %v661 = vsel %vm653, 9, %v645
    %v662 = vsel %vm654, 9, %v646
    %v663 = vsel %vm655, 9, %v647
    %v664 = vsel %vm656, 9, %v648
    %v665 = vsel %vm657, 9, %v649
    %v666 = vsel %vm658, 9, %v650
    %v667 = vmul.u32 %v659, %v547
    %v668 = vmul.u32 %v660, %v548
    %v669 = vmul.u32 %v661, %v549
    %v670 = vmul.u32 %v662, %v550
    %v671 = vmul.u32 %v663, %v551
    %v672 = vmul.u32 %v664, %v552
    %v673 = vmul.u32 %v665, %v553
    %v674 = vmul.u32 %v666, %v554
    %v675 = vadd.s32 %v528, %v667
    %v676 = vadd.s32 %v529, %v668
    %v677 = vadd.s32 %v530, %v669
    %v678 = vadd.s32 %v531, %v670
    %v679 = vadd.s32 %v532, %v671
    %v680 = vadd.s32 %v533, %v672
    %v681 = vadd.s32 %v534, %v673
    %v682 = vadd.s32 %v535, %v674
    %v683 = vsub.s32 %v536, %v547
    %v684 = vsub.s32 %v537, %v548
    %v685 = vsub.s32 %v538, %v549
    %v686 = vsub.s32 %v539, %v550
    %v687 = vsub.s32 %v540, %v551
    %v688 = vsub.s32 %v541, %v552
    %v689 = vsub.s32 %v542, %v553
    %v690 = vsub.s32 %v543, %v554
    %s691 = scalar_lea.vmem [#allocation2], 112
    %v692 = vld [vmem:[%s691] sm:$0xff]
    %v693 = vld [vmem:[%s691 + $0x8] sm:$0xff]
    %v694 = vunpack.c.0.s8 %v692
    %v695 = vunpack.c.1.s8 %v692
    %v696 = vunpack.c.2.s8 %v692
    %v697 = vunpack.c.3.s8 %v692
    %v698 = vunpack.c.0.s8 %v693
    %v699 = vunpack.c.1.s8 %v693
    %v700 = vunpack.c.2.s8 %v693
    %v701 = vunpack.c.3.s8 %v693
    %vm702 = vcmp.eq.s32.totalorder %v683, 1
    %vm703 = vcmp.eq.s32.totalorder %v684, 1
    %vm704 = vcmp.eq.s32.totalorder %v685, 1
    %vm705 = vcmp.eq.s32.totalorder %v686, 1
    %vm706 = vcmp.eq.s32.totalorder %v687, 1
    %vm707 = vcmp.eq.s32.totalorder %v688, 1
    %vm708 = vcmp.eq.s32.totalorder %v689, 1
    %vm709 = vcmp.eq.s32.totalorder %v690, 1
    %v710 = vsel %vm702, 8, 0
    %v711 = vsel %vm703, 8, 0
    %v712 = vsel %vm704, 8, 0
    %v713 = vsel %vm705, 8, 0
    %v714 = vsel %vm706, 8, 0
    %v715 = vsel %vm707, 8, 0
    %v716 = vsel %vm708, 8, 0
    %v717 = vsel %vm709, 8, 0
    %vm718 = vcmp.eq.s32.totalorder %v683, 2
    %vm719 = vcmp.eq.s32.totalorder %v684, 2
    %vm720 = vcmp.eq.s32.totalorder %v685, 2
    %vm721 = vcmp.eq.s32.totalorder %v686, 2
    %vm722 = vcmp.eq.s32.totalorder %v687, 2
    %vm723 = vcmp.eq.s32.totalorder %v688, 2
    %vm724 = vcmp.eq.s32.totalorder %v689, 2
    %vm725 = vcmp.eq.s32.totalorder %v690, 2
    %v726 = vsel %vm718, 28, %v710
    %v727 = vsel %vm719, 28, %v711
    %v728 = vsel %vm720, 28, %v712
    %v729 = vsel %vm721, 28, %v713
    %v730 = vsel %vm722, 28, %v714
    %v731 = vsel %vm723, 28, %v715
    %v732 = vsel %vm724, 28, %v716
    %v733 = vsel %vm725, 28, %v717
    %vm734 = vcmp.eq.s32.totalorder %v683, 3
    %vm735 = vcmp.eq.s32.totalorder %v684, 3
    %vm736 = vcmp.eq.s32.totalorder %v685, 3
    %vm737 = vcmp.eq.s32.totalorder %v686, 3
    %vm738 = vcmp.eq.s32.totalorder %v687, 3
    %vm739 = vcmp.eq.s32.totalorder %v688, 3
    %vm740 = vcmp.eq.s32.totalorder %v689, 3
    %vm741 = vcmp.eq.s32.totalorder %v690, 3
    %v742 = vsel %vm734, 56, %v726
    %v743 = vsel %vm735, 56, %v727
    %v744 = vsel %vm736, 56, %v728
    %v745 = vsel %vm737, 56, %v729
    %v746 = vsel %vm738, 56, %v730
    %v747 = vsel %vm739, 56, %v731
    %v748 = vsel %vm740, 56, %v732
    %v749 = vsel %vm741, 56, %v733
    %vm750 = vcmp.eq.s32.totalorder %v683, 4
    %vm751 = vcmp.eq.s32.totalorder %v684, 4
    %vm752 = vcmp.eq.s32.totalorder %v685, 4
    %vm753 = vcmp.eq.s32.totalorder %v686, 4
    %vm754 = vcmp.eq.s32.totalorder %v687, 4
    %vm755 = vcmp.eq.s32.totalorder %v688, 4
    %vm756 = vcmp.eq.s32.totalorder %v689, 4
    %vm757 = vcmp.eq.s32.totalorder %v690, 4
    %v758 = vsel %vm750, 70, %v742
    %v759 = vsel %vm751, 70, %v743
    %v760 = vsel %vm752, 70, %v744
    %v761 = vsel %vm753, 70, %v745
    %v762 = vsel %vm754, 70, %v746
    %v763 = vsel %vm755, 70, %v747
    %v764 = vsel %vm756, 70, %v748
    %v765 = vsel %vm757, 70, %v749
    %vm766 = vcmp.eq.s32.totalorder %v683, 5
    %vm767 = vcmp.eq.s32.totalorder %v684, 5
    %vm768 = vcmp.eq.s32.totalorder %v685, 5
    %vm769 = vcmp.eq.s32.totalorder %v686, 5
    %vm770 = vcmp.eq.s32.totalorder %v687, 5
    %vm771 = vcmp.eq.s32.totalorder %v688, 5
    %vm772 = vcmp.eq.s32.totalorder %v689, 5
    %vm773 = vcmp.eq.s32.totalorder %v690, 5
    %v774 = vsel %vm766, 56, %v758
    %v775 = vsel %vm767, 56, %v759
    %v776 = vsel %vm768, 56, %v760
    %v777 = vsel %vm769, 56, %v761
    %v778 = vsel %vm770, 56, %v762
    %v779 = vsel %vm771, 56, %v763
    %v780 = vsel %vm772, 56, %v764
    %v781 = vsel %vm773, 56, %v765
    %vm782 = vcmp.eq.s32.totalorder %v683, 6
    %vm783 = vcmp.eq.s32.totalorder %v684, 6
    %vm784 = vcmp.eq.s32.totalorder %v685, 6
    %vm785 = vcmp.eq.s32.totalorder %v686, 6
    %vm786 = vcmp.eq.s32.totalorder %v687, 6
    %vm787 = vcmp.eq.s32.totalorder %v688, 6
    %vm788 = vcmp.eq.s32.totalorder %v689, 6
    %vm789 = vcmp.eq.s32.totalorder %v690, 6
    %v790 = vsel %vm782, 28, %v774
    %v791 = vsel %vm783, 28, %v775
    %v792 = vsel %vm784, 28, %v776
    %v793 = vsel %vm785, 28, %v777
    %v794 = vsel %vm786, 28, %v778
    %v795 = vsel %vm787, 28, %v779
    %v796 = vsel %vm788, 28, %v780
    %v797 = vsel %vm789, 28, %v781
    %vm798 = vcmp.eq.s32.totalorder %v683, 7
    %vm799 = vcmp.eq.s32.totalorder %v684, 7
    %vm800 = vcmp.eq.s32.totalorder %v685, 7
    %vm801 = vcmp.eq.s32.totalorder %v686, 7
    %vm802 = vcmp.eq.s32.totalorder %v687, 7
    %vm803 = vcmp.eq.s32.totalorder %v688, 7
    %vm804 = vcmp.eq.s32.totalorder %v689, 7
    %vm805 = vcmp.eq.s32.totalorder %v690, 7
    %v806 = vsel %vm798, 8, %v790
    %v807 = vsel %vm799, 8, %v791
    %v808 = vsel %vm800, 8, %v792
    %v809 = vsel %vm801, 8, %v793
    %v810 = vsel %vm802, 8, %v794
    %v811 = vsel %vm803, 8, %v795
    %v812 = vsel %vm804, 8, %v796
    %v813 = vsel %vm805, 8, %v797
    %vm814 = vcmp.eq.s32.totalorder %v683, 8
    %vm815 = vcmp.eq.s32.totalorder %v684, 8
    %vm816 = vcmp.eq.s32.totalorder %v685, 8
    %vm817 = vcmp.eq.s32.totalorder %v686, 8
    %vm818 = vcmp.eq.s32.totalorder %v687, 8
    %vm819 = vcmp.eq.s32.totalorder %v688, 8
    %vm820 = vcmp.eq.s32.totalorder %v689, 8
    %vm821 = vcmp.eq.s32.totalorder %v690, 8
    %v822 = vsel %vm814, 1, %v806
    %v823 = vsel %vm815, 1, %v807
    %v824 = vsel %vm816, 1, %v808
    %v825 = vsel %vm817, 1, %v809
    %v826 = vsel %vm818, 1, %v810
    %v827 = vsel %vm819, 1, %v811
    %v828 = vsel %vm820, 1, %v812
    %v829 = vsel %vm821, 1, %v813
    %v830 = vmul.u32 %v822, %v694
    %v831 = vmul.u32 %v823, %v695
    %v832 = vmul.u32 %v824, %v696
    %v833 = vmul.u32 %v825, %v697
    %v834 = vmul.u32 %v826, %v698
    %v835 = vmul.u32 %v827, %v699
    %v836 = vmul.u32 %v828, %v700
    %v837 = vmul.u32 %v829, %v701
    %v838 = vadd.s32 %v675, %v830
    %v839 = vadd.s32 %v676, %v831
    %v840 = vadd.s32 %v677, %v832
    %v841 = vadd.s32 %v678, %v833
    %v842 = vadd.s32 %v679, %v834
    %v843 = vadd.s32 %v680, %v835
    %v844 = vadd.s32 %v681, %v836
    %v845 = vadd.s32 %v682, %v837
    %v846 = vsub.s32 %v683, %v694
    %v847 = vsub.s32 %v684, %v695
    %v848 = vsub.s32 %v685, %v696
    %v849 = vsub.s32 %v686, %v697
    %v850 = vsub.s32 %v687, %v698
    %v851 = vsub.s32 %v688, %v699
    %v852 = vsub.s32 %v689, %v700
    %v853 = vsub.s32 %v690, %v701
    %s854 = scalar_lea.vmem [#allocation2], 128
    %v855 = vld [vmem:[%s854] sm:$0xff]
    %v856 = vld [vmem:[%s854 + $0x8] sm:$0xff]
    %v857 = vunpack.c.0.s8 %v855
    %v858 = vunpack.c.1.s8 %v855
    %v859 = vunpack.c.2.s8 %v855
    %v860 = vunpack.c.3.s8 %v855
    %v861 = vunpack.c.0.s8 %v856
    %v862 = vunpack.c.1.s8 %v856
    %v863 = vunpack.c.2.s8 %v856
    %v864 = vunpack.c.3.s8 %v856
    %vm865 = vcmp.eq.s32.totalorder %v846, 1
    %vm866 = vcmp.eq.s32.totalorder %v847, 1
    %vm867 = vcmp.eq.s32.totalorder %v848, 1
    %vm868 = vcmp.eq.s32.totalorder %v849, 1
    %vm869 = vcmp.eq.s32.totalorder %v850, 1
    %vm870 = vcmp.eq.s32.totalorder %v851, 1
    %vm871 = vcmp.eq.s32.totalorder %v852, 1
    %vm872 = vcmp.eq.s32.totalorder %v853, 1
    %v873 = vsel %vm865, 7, 0
    %v874 = vsel %vm866, 7, 0
    %v875 = vsel %vm867, 7, 0
    %v876 = vsel %vm868, 7, 0
    %v877 = vsel %vm869, 7, 0
    %v878 = vsel %vm870, 7, 0
    %v879 = vsel %vm871, 7, 0
    %v880 = vsel %vm872, 7, 0
    %vm881 = vcmp.eq.s32.totalorder %v846, 2
    %vm882 = vcmp.eq.s32.totalorder %v847, 2
    %vm883 = vcmp.eq.s32.totalorder %v848, 2
    %vm884 = vcmp.eq.s32.totalorder %v849, 2
    %vm885 = vcmp.eq.s32.totalorder %v850, 2
    %vm886 = vcmp.eq.s32.totalorder %v851, 2
    %vm887 = vcmp.eq.s32.totalorder %v852, 2
    %vm888 = vcmp.eq.s32.totalorder %v853, 2
    %v889 = vsel %vm881, 21, %v873
    %v890 = vsel %vm882, 21, %v874
    %v891 = vsel %vm883, 21, %v875
    %v892 = vsel %vm884, 21, %v876
    %v893 = vsel %vm885, 21, %v877
    %v894 = vsel %vm886, 21, %v878
    %v895 = vsel %vm887, 21, %v879
    %v896 = vsel %vm888, 21, %v880
    %vm897 = vcmp.eq.s32.totalorder %v846, 3
    %vm898 = vcmp.eq.s32.totalorder %v847, 3
    %vm899 = vcmp.eq.s32.totalorder %v848, 3
    %vm900 = vcmp.eq.s32.totalorder %v849, 3
    %vm901 = vcmp.eq.s32.totalorder %v850, 3
    %vm902 = vcmp.eq.s32.totalorder %v851, 3
    %vm903 = vcmp.eq.s32.totalorder %v852, 3
    %vm904 = vcmp.eq.s32.totalorder %v853, 3
    %v905 = vsel %vm897, 35, %v889
    %v906 = vsel %vm898, 35, %v890
    %v907 = vsel %vm899, 35, %v891
    %v908 = vsel %vm900, 35, %v892
    %v909 = vsel %vm901, 35, %v893
    %v910 = vsel %vm902, 35, %v894
    %v911 = vsel %vm903, 35, %v895
    %v912 = vsel %vm904, 35, %v896
    %vm913 = vcmp.eq.s32.totalorder %v846, 4
    %vm914 = vcmp.eq.s32.totalorder %v847, 4
    %vm915 = vcmp.eq.s32.totalorder %v848, 4
    %vm916 = vcmp.eq.s32.totalorder %v849, 4
    %vm917 = vcmp.eq.s32.totalorder %v850, 4
    %vm918 = vcmp.eq.s32.totalorder %v851, 4
    %vm919 = vcmp.eq.s32.totalorder %v852, 4
    %vm920 = vcmp.eq.s32.totalorder %v853, 4
    %v921 = vsel %vm913, 35, %v905
    %v922 = vsel %vm914, 35, %v906
    %v923 = vsel %vm915, 35, %v907
    %v924 = vsel %vm916, 35, %v908
    %v925 = vsel %vm917, 35, %v909
    %v926 = vsel %vm918, 35, %v910
    %v927 = vsel %vm919, 35, %v911
    %v928 = vsel %vm920, 35, %v912
    %vm929 = vcmp.eq.s32.totalorder %v846, 5
    %vm930 = vcmp.eq.s32.totalorder %v847, 5
    %vm931 = vcmp.eq.s32.totalorder %v848, 5
    %vm932 = vcmp.eq.s32.totalorder %v849, 5
    %vm933 = vcmp.eq.s32.totalorder %v850, 5
    %vm934 = vcmp.eq.s32.totalorder %v851, 5
    %vm935 = vcmp.eq.s32.totalorder %v852, 5
    %vm936 = vcmp.eq.s32.totalorder %v853, 5
    %v937 = vsel %vm929, 21, %v921
    %v938 = vsel %vm930, 21, %v922
    %v939 = vsel %vm931, 21, %v923
    %v940 = vsel %vm932, 21, %v924
    %v941 = vsel %vm933, 21, %v925
    %v942 = vsel %vm934, 21, %v926
    %v943 = vsel %vm935, 21, %v927
    %v944 = vsel %vm936, 21, %v928
    %vm945 = vcmp.eq.s32.totalorder %v846, 6
    %vm946 = vcmp.eq.s32.totalorder %v847, 6
    %vm947 = vcmp.eq.s32.totalorder %v848, 6
    %vm948 = vcmp.eq.s32.totalorder %v849, 6
    %vm949 = vcmp.eq.s32.totalorder %v850, 6
    %vm950 = vcmp.eq.s32.totalorder %v851, 6
    %vm951 = vcmp.eq.s32.totalorder %v852, 6
    %vm952 = vcmp.eq.s32.totalorder %v853, 6
    %v953 = vsel %vm945, 7, %v937
    %v954 = vsel %vm946, 7, %v938
    %v955 = vsel %vm947, 7, %v939
    %v956 = vsel %vm948, 7, %v940
    %v957 = vsel %vm949, 7, %v941
    %v958 = vsel %vm950, 7, %v942
    %v959 = vsel %vm951, 7, %v943
    %v960 = vsel %vm952, 7, %v944
    %vm961 = vcmp.eq.s32.totalorder %v846, 7
    %vm962 = vcmp.eq.s32.totalorder %v847, 7
    %vm963 = vcmp.eq.s32.totalorder %v848, 7
    %vm964 = vcmp.eq.s32.totalorder %v849, 7
    %vm965 = vcmp.eq.s32.totalorder %v850, 7
    %vm966 = vcmp.eq.s32.totalorder %v851, 7
    %vm967 = vcmp.eq.s32.totalorder %v852, 7
    %vm968 = vcmp.eq.s32.totalorder %v853, 7
    %v969 = vsel %vm961, 1, %v953
    %v970 = vsel %vm962, 1, %v954
    %v971 = vsel %vm963, 1, %v955
    %v972 = vsel %vm964, 1, %v956
    %v973 = vsel %vm965, 1, %v957
    %v974 = vsel %vm966, 1, %v958
    %v975 = vsel %vm967, 1, %v959
    %v976 = vsel %vm968, 1, %v960
    %v977 = vmul.u32 %v969, %v857
    %v978 = vmul.u32 %v970, %v858
    %v979 = vmul.u32 %v971, %v859
    %v980 = vmul.u32 %v972, %v860
    %v981 = vmul.u32 %v973, %v861
    %v982 = vmul.u32 %v974, %v862
    %v983 = vmul.u32 %v975, %v863
    %v984 = vmul.u32 %v976, %v864
    %v985 = vadd.s32 %v838, %v977
    %v986 = vadd.s32 %v839, %v978
    %v987 = vadd.s32 %v840, %v979
    %v988 = vadd.s32 %v841, %v980
    %v989 = vadd.s32 %v842, %v981
    %v990 = vadd.s32 %v843, %v982
    %v991 = vadd.s32 %v844, %v983
    %v992 = vadd.s32 %v845, %v984
    %v993 = vsub.s32 %v846, %v857
    %v994 = vsub.s32 %v847, %v858
    %v995 = vsub.s32 %v848, %v859
    %v996 = vsub.s32 %v849, %v860
    %v997 = vsub.s32 %v850, %v861
    %v998 = vsub.s32 %v851, %v862
    %v999 = vsub.s32 %v852, %v863
    %v1000 = vsub.s32 %v853, %v864
    %s1001 = scalar_lea.vmem [#allocation2], 144
    %v1002 = vld [vmem:[%s1001] sm:$0xff]
    %v1003 = vld [vmem:[%s1001 + $0x8] sm:$0xff]
    %v1004 = vunpack.c.0.s8 %v1002
    %v1005 = vunpack.c.1.s8 %v1002
    %v1006 = vunpack.c.2.s8 %v1002
    %v1007 = vunpack.c.3.s8 %v1002
    %v1008 = vunpack.c.0.s8 %v1003
    %v1009 = vunpack.c.1.s8 %v1003
    %v1010 = vunpack.c.2.s8 %v1003
    %v1011 = vunpack.c.3.s8 %v1003
    %vm1012 = vcmp.eq.s32.totalorder %v993, 1
    %vm1013 = vcmp.eq.s32.totalorder %v994, 1
    %vm1014 = vcmp.eq.s32.totalorder %v995, 1
    %vm1015 = vcmp.eq.s32.totalorder %v996, 1
    %vm1016 = vcmp.eq.s32.totalorder %v997, 1
    %vm1017 = vcmp.eq.s32.totalorder %v998, 1
    %vm1018 = vcmp.eq.s32.totalorder %v999, 1
    %vm1019 = vcmp.eq.s32.totalorder %v1000, 1
    %v1020 = vsel %vm1012, 6, 0
    %v1021 = vsel %vm1013, 6, 0
    %v1022 = vsel %vm1014, 6, 0
    %v1023 = vsel %vm1015, 6, 0
    %v1024 = vsel %vm1016, 6, 0
    %v1025 = vsel %vm1017, 6, 0
    %v1026 = vsel %vm1018, 6, 0
    %v1027 = vsel %vm1019, 6, 0
    %vm1028 = vcmp.eq.s32.totalorder %v993, 2
    %vm1029 = vcmp.eq.s32.totalorder %v994, 2
    %vm1030 = vcmp.eq.s32.totalorder %v995, 2
    %vm1031 = vcmp.eq.s32.totalorder %v996, 2
    %vm1032 = vcmp.eq.s32.totalorder %v997, 2
    %vm1033 = vcmp.eq.s32.totalorder %v998, 2
    %vm1034 = vcmp.eq.s32.totalorder %v999, 2
    %vm1035 = vcmp.eq.s32.totalorder %v1000, 2
    %v1036 = vsel %vm1028, 15, %v1020
    %v1037 = vsel %vm1029, 15, %v1021
    %v1038 = vsel %vm1030, 15, %v1022
    %v1039 = vsel %vm1031, 15, %v1023
    %v1040 = vsel %vm1032, 15, %v1024
    %v1041 = vsel %vm1033, 15, %v1025
    %v1042 = vsel %vm1034, 15, %v1026
    %v1043 = vsel %vm1035, 15, %v1027
    %vm1044 = vcmp.eq.s32.totalorder %v993, 3
    %vm1045 = vcmp.eq.s32.totalorder %v994, 3
    %vm1046 = vcmp.eq.s32.totalorder %v995, 3
    %vm1047 = vcmp.eq.s32.totalorder %v996, 3
    %vm1048 = vcmp.eq.s32.totalorder %v997, 3
    %vm1049 = vcmp.eq.s32.totalorder %v998, 3
    %vm1050 = vcmp.eq.s32.totalorder %v999, 3
    %vm1051 = vcmp.eq.s32.totalorder %v1000, 3
    %v1052 = vsel %vm1044, 20, %v1036
    %v1053 = vsel %vm1045, 20, %v1037
    %v1054 = vsel %vm1046, 20, %v1038
    %v1055 = vsel %vm1047, 20, %v1039
    %v1056 = vsel %vm1048, 20, %v1040
    %v1057 = vsel %vm1049, 20, %v1041
    %v1058 = vsel %vm1050, 20, %v1042
    %v1059 = vsel %vm1051, 20, %v1043
    %vm1060 = vcmp.eq.s32.totalorder %v993, 4
    %vm1061 = vcmp.eq.s32.totalorder %v994, 4
    %vm1062 = vcmp.eq.s32.totalorder %v995, 4
    %vm1063 = vcmp.eq.s32.totalorder %v996, 4
    %vm1064 = vcmp.eq.s32.totalorder %v997, 4
    %vm1065 = vcmp.eq.s32.totalorder %v998, 4
    %vm1066 = vcmp.eq.s32.totalorder %v999, 4
    %vm1067 = vcmp.eq.s32.totalorder %v1000, 4
    %v1068 = vsel %vm1060, 15, %v1052
    %v1069 = vsel %vm1061, 15, %v1053
    %v1070 = vsel %vm1062, 15, %v1054
    %v1071 = vsel %vm1063, 15, %v1055
    %v1072 = vsel %vm1064, 15, %v1056
    %v1073 = vsel %vm1065, 15, %v1057
    %v1074 = vsel %vm1066, 15, %v1058
    %v1075 = vsel %vm1067, 15, %v1059
    %vm1076 = vcmp.eq.s32.totalorder %v993, 5
    %vm1077 = vcmp.eq.s32.totalorder %v994, 5
    %vm1078 = vcmp.eq.s32.totalorder %v995, 5
    %vm1079 = vcmp.eq.s32.totalorder %v996, 5
    %vm1080 = vcmp.eq.s32.totalorder %v997, 5
    %vm1081 = vcmp.eq.s32.totalorder %v998, 5
    %vm1082 = vcmp.eq.s32.totalorder %v999, 5
    %vm1083 = vcmp.eq.s32.totalorder %v1000, 5
    %v1084 = vsel %vm1076, 6, %v1068
    %v1085 = vsel %vm1077, 6, %v1069
    %v1086 = vsel %vm1078, 6, %v1070
    %v1087 = vsel %vm1079, 6, %v1071
    %v1088 = vsel %vm1080, 6, %v1072
    %v1089 = vsel %vm1081, 6, %v1073
    %v1090 = vsel %vm1082, 6, %v1074
    %v1091 = vsel %vm1083, 6, %v1075
    %vm1092 = vcmp.eq.s32.totalorder %v993, 6
    %vm1093 = vcmp.eq.s32.totalorder %v994, 6
    %vm1094 = vcmp.eq.s32.totalorder %v995, 6
    %vm1095 = vcmp.eq.s32.totalorder %v996, 6
    %vm1096 = vcmp.eq.s32.totalorder %v997, 6
    %vm1097 = vcmp.eq.s32.totalorder %v998, 6
    %vm1098 = vcmp.eq.s32.totalorder %v999, 6
    %vm1099 = vcmp.eq.s32.totalorder %v1000, 6
    %v1100 = vsel %vm1092, 1, %v1084
    %v1101 = vsel %vm1093, 1, %v1085
    %v1102 = vsel %vm1094, 1, %v1086
    %v1103 = vsel %vm1095, 1, %v1087
    %v1104 = vsel %vm1096, 1, %v1088
    %v1105 = vsel %vm1097, 1, %v1089
    %v1106 = vsel %vm1098, 1, %v1090
    %v1107 = vsel %vm1099, 1, %v1091
    %v1108 = vmul.u32 %v1100, %v1004
    %v1109 = vmul.u32 %v1101, %v1005
    %v1110 = vmul.u32 %v1102, %v1006
    %v1111 = vmul.u32 %v1103, %v1007
    %v1112 = vmul.u32 %v1104, %v1008
    %v1113 = vmul.u32 %v1105, %v1009
    %v1114 = vmul.u32 %v1106, %v1010
    %v1115 = vmul.u32 %v1107, %v1011
    %v1116 = vadd.s32 %v985, %v1108
    %v1117 = vadd.s32 %v986, %v1109
    %v1118 = vadd.s32 %v987, %v1110
    %v1119 = vadd.s32 %v988, %v1111
    %v1120 = vadd.s32 %v989, %v1112
    %v1121 = vadd.s32 %v990, %v1113
    %v1122 = vadd.s32 %v991, %v1114
    %v1123 = vadd.s32 %v992, %v1115
    %v1124 = vsub.s32 %v993, %v1004
    %v1125 = vsub.s32 %v994, %v1005
    %v1126 = vsub.s32 %v995, %v1006
    %v1127 = vsub.s32 %v996, %v1007
    %v1128 = vsub.s32 %v997, %v1008
    %v1129 = vsub.s32 %v998, %v1009
    %v1130 = vsub.s32 %v999, %v1010
    %v1131 = vsub.s32 %v1000, %v1011
    %s1132 = scalar_lea.vmem [#allocation2], 160
    %v1133 = vld [vmem:[%s1132] sm:$0xff]
    %v1134 = vld [vmem:[%s1132 + $0x8] sm:$0xff]
    %v1135 = vunpack.c.0.s8 %v1133
    %v1136 = vunpack.c.1.s8 %v1133
    %v1137 = vunpack.c.2.s8 %v1133
    %v1138 = vunpack.c.3.s8 %v1133
    %v1139 = vunpack.c.0.s8 %v1134
    %v1140 = vunpack.c.1.s8 %v1134
    %v1141 = vunpack.c.2.s8 %v1134
    %v1142 = vunpack.c.3.s8 %v1134
    %vm1143 = vcmp.eq.s32.totalorder %v1124, 1
    %vm1144 = vcmp.eq.s32.totalorder %v1125, 1
    %vm1145 = vcmp.eq.s32.totalorder %v1126, 1
    %vm1146 = vcmp.eq.s32.totalorder %v1127, 1
    %vm1147 = vcmp.eq.s32.totalorder %v1128, 1
    %vm1148 = vcmp.eq.s32.totalorder %v1129, 1
    %vm1149 = vcmp.eq.s32.totalorder %v1130, 1
    %vm1150 = vcmp.eq.s32.totalorder %v1131, 1
    %v1151 = vsel %vm1143, 5, 0
    %v1152 = vsel %vm1144, 5, 0
    %v1153 = vsel %vm1145, 5, 0
    %v1154 = vsel %vm1146, 5, 0
    %v1155 = vsel %vm1147, 5, 0
    %v1156 = vsel %vm1148, 5, 0
    %v1157 = vsel %vm1149, 5, 0
    %v1158 = vsel %vm1150, 5, 0
    %vm1159 = vcmp.eq.s32.totalorder %v1124, 2
    %vm1160 = vcmp.eq.s32.totalorder %v1125, 2
    %vm1161 = vcmp.eq.s32.totalorder %v1126, 2
    %vm1162 = vcmp.eq.s32.totalorder %v1127, 2
    %vm1163 = vcmp.eq.s32.totalorder %v1128, 2
    %vm1164 = vcmp.eq.s32.totalorder %v1129, 2
    %vm1165 = vcmp.eq.s32.totalorder %v1130, 2
    %vm1166 = vcmp.eq.s32.totalorder %v1131, 2
    %v1167 = vsel %vm1159, 10, %v1151
    %v1168 = vsel %vm1160, 10, %v1152
    %v1169 = vsel %vm1161, 10, %v1153
    %v1170 = vsel %vm1162, 10, %v1154
    %v1171 = vsel %vm1163, 10, %v1155
    %v1172 = vsel %vm1164, 10, %v1156
    %v1173 = vsel %vm1165, 10, %v1157
    %v1174 = vsel %vm1166, 10, %v1158
    %vm1175 = vcmp.eq.s32.totalorder %v1124, 3
    %vm1176 = vcmp.eq.s32.totalorder %v1125, 3
    %vm1177 = vcmp.eq.s32.totalorder %v1126, 3
    %vm1178 = vcmp.eq.s32.totalorder %v1127, 3
    %vm1179 = vcmp.eq.s32.totalorder %v1128, 3
    %vm1180 = vcmp.eq.s32.totalorder %v1129, 3
    %vm1181 = vcmp.eq.s32.totalorder %v1130, 3
    %vm1182 = vcmp.eq.s32.totalorder %v1131, 3
    %v1183 = vsel %vm1175, 10, %v1167
    %v1184 = vsel %vm1176, 10, %v1168
    %v1185 = vsel %vm1177, 10, %v1169
    %v1186 = vsel %vm1178, 10, %v1170
    %v1187 = vsel %vm1179, 10, %v1171
    %v1188 = vsel %vm1180, 10, %v1172
    %v1189 = vsel %vm1181, 10, %v1173
    %v1190 = vsel %vm1182, 10, %v1174
    %vm1191 = vcmp.eq.s32.totalorder %v1124, 4
    %vm1192 = vcmp.eq.s32.totalorder %v1125, 4
    %vm1193 = vcmp.eq.s32.totalorder %v1126, 4
    %vm1194 = vcmp.eq.s32.totalorder %v1127, 4
    %vm1195 = vcmp.eq.s32.totalorder %v1128, 4
    %vm1196 = vcmp.eq.s32.totalorder %v1129, 4
    %vm1197 = vcmp.eq.s32.totalorder %v1130, 4
    %vm1198 = vcmp.eq.s32.totalorder %v1131, 4
    %v1199 = vsel %vm1191, 5, %v1183
    %v1200 = vsel %vm1192, 5, %v1184
    %v1201 = vsel %vm1193, 5, %v1185
    %v1202 = vsel %vm1194, 5, %v1186
    %v1203 = vsel %vm1195, 5, %v1187
    %v1204 = vsel %vm1196, 5, %v1188
    %v1205 = vsel %vm1197, 5, %v1189
    %v1206 = vsel %vm1198, 5, %v1190
    %vm1207 = vcmp.eq.s32.totalorder %v1124, 5
    %vm1208 = vcmp.eq.s32.totalorder %v1125, 5
    %vm1209 = vcmp.eq.s32.totalorder %v1126, 5
    %vm1210 = vcmp.eq.s32.totalorder %v1127, 5
    %vm1211 = vcmp.eq.s32.totalorder %v1128, 5
    %vm1212 = vcmp.eq.s32.totalorder %v1129, 5
    %vm1213 = vcmp.eq.s32.totalorder %v1130, 5
    %vm1214 = vcmp.eq.s32.totalorder %v1131, 5
    %v1215 = vsel %vm1207, 1, %v1199
    %v1216 = vsel %vm1208, 1, %v1200
    %v1217 = vsel %vm1209, 1, %v1201
    %v1218 = vsel %vm1210, 1, %v1202
    %v1219 = vsel %vm1211, 1, %v1203
    %v1220 = vsel %vm1212, 1, %v1204
    %v1221 = vsel %vm1213, 1, %v1205
    %v1222 = vsel %vm1214, 1, %v1206
    %v1223 = vmul.u32 %v1215, %v1135
    %v1224 = vmul.u32 %v1216, %v1136
    %v1225 = vmul.u32 %v1217, %v1137
    %v1226 = vmul.u32 %v1218, %v1138
    %v1227 = vmul.u32 %v1219, %v1139
    %v1228 = vmul.u32 %v1220, %v1140
    %v1229 = vmul.u32 %v1221, %v1141
    %v1230 = vmul.u32 %v1222, %v1142
    %v1231 = vadd.s32 %v1116, %v1223
    %v1232 = vadd.s32 %v1117, %v1224
    %v1233 = vadd.s32 %v1118, %v1225
    %v1234 = vadd.s32 %v1119, %v1226
    %v1235 = vadd.s32 %v1120, %v1227
    %v1236 = vadd.s32 %v1121, %v1228
    %v1237 = vadd.s32 %v1122, %v1229
    %v1238 = vadd.s32 %v1123, %v1230
    %v1239 = vsub.s32 %v1124, %v1135
    %v1240 = vsub.s32 %v1125, %v1136
    %v1241 = vsub.s32 %v1126, %v1137
    %v1242 = vsub.s32 %v1127, %v1138
    %v1243 = vsub.s32 %v1128, %v1139
    %v1244 = vsub.s32 %v1129, %v1140
    %v1245 = vsub.s32 %v1130, %v1141
    %v1246 = vsub.s32 %v1131, %v1142
    %s1247 = scalar_lea.vmem [#allocation2], 176
    %v1248 = vld [vmem:[%s1247] sm:$0xff]
    %v1249 = vld [vmem:[%s1247 + $0x8] sm:$0xff]
    %v1250 = vunpack.c.0.s8 %v1248
    %v1251 = vunpack.c.1.s8 %v1248
    %v1252 = vunpack.c.2.s8 %v1248
    %v1253 = vunpack.c.3.s8 %v1248
    %v1254 = vunpack.c.0.s8 %v1249
    %v1255 = vunpack.c.1.s8 %v1249
    %v1256 = vunpack.c.2.s8 %v1249
    %v1257 = vunpack.c.3.s8 %v1249
    %vm1258 = vcmp.eq.s32.totalorder %v1239, 1
    %vm1259 = vcmp.eq.s32.totalorder %v1240, 1
    %vm1260 = vcmp.eq.s32.totalorder %v1241, 1
    %vm1261 = vcmp.eq.s32.totalorder %v1242, 1
    %vm1262 = vcmp.eq.s32.totalorder %v1243, 1
    %vm1263 = vcmp.eq.s32.totalorder %v1244, 1
    %vm1264 = vcmp.eq.s32.totalorder %v1245, 1
    %vm1265 = vcmp.eq.s32.totalorder %v1246, 1
    %v1266 = vsel %vm1258, 4, 0
    %v1267 = vsel %vm1259, 4, 0
    %v1268 = vsel %vm1260, 4, 0
    %v1269 = vsel %vm1261, 4, 0
    %v1270 = vsel %vm1262, 4, 0
    %v1271 = vsel %vm1263, 4, 0
    %v1272 = vsel %vm1264, 4, 0
    %v1273 = vsel %vm1265, 4, 0
    %vm1274 = vcmp.eq.s32.totalorder %v1239, 2
    %vm1275 = vcmp.eq.s32.totalorder %v1240, 2
    %vm1276 = vcmp.eq.s32.totalorder %v1241, 2
    %vm1277 = vcmp.eq.s32.totalorder %v1242, 2
    %vm1278 = vcmp.eq.s32.totalorder %v1243, 2
    %vm1279 = vcmp.eq.s32.totalorder %v1244, 2
    %vm1280 = vcmp.eq.s32.totalorder %v1245, 2
    %vm1281 = vcmp.eq.s32.totalorder %v1246, 2
    %v1282 = vsel %vm1274, 6, %v1266
    %v1283 = vsel %vm1275, 6, %v1267
    %v1284 = vsel %vm1276, 6, %v1268
    %v1285 = vsel %vm1277, 6, %v1269
    %v1286 = vsel %vm1278, 6, %v1270
    %v1287 = vsel %vm1279, 6, %v1271
    %v1288 = vsel %vm1280, 6, %v1272
    %v1289 = vsel %vm1281, 6, %v1273
    %vm1290 = vcmp.eq.s32.totalorder %v1239, 3
    %vm1291 = vcmp.eq.s32.totalorder %v1240, 3
    %vm1292 = vcmp.eq.s32.totalorder %v1241, 3
    %vm1293 = vcmp.eq.s32.totalorder %v1242, 3
    %vm1294 = vcmp.eq.s32.totalorder %v1243, 3
    %vm1295 = vcmp.eq.s32.totalorder %v1244, 3
    %vm1296 = vcmp.eq.s32.totalorder %v1245, 3
    %vm1297 = vcmp.eq.s32.totalorder %v1246, 3
    %v1298 = vsel %vm1290, 4, %v1282
    %v1299 = vsel %vm1291, 4, %v1283
    %v1300 = vsel %vm1292, 4, %v1284
    %v1301 = vsel %vm1293, 4, %v1285
    %v1302 = vsel %vm1294, 4, %v1286
    %v1303 = vsel %vm1295, 4, %v1287
    %v1304 = vsel %vm1296, 4, %v1288
    %v1305 = vsel %vm1297, 4, %v1289
    %vm1306 = vcmp.eq.s32.totalorder %v1239, 4
    %vm1307 = vcmp.eq.s32.totalorder %v1240, 4
    %vm1308 = vcmp.eq.s32.totalorder %v1241, 4
    %vm1309 = vcmp.eq.s32.totalorder %v1242, 4
    %vm1310 = vcmp.eq.s32.totalorder %v1243, 4
    %vm1311 = vcmp.eq.s32.totalorder %v1244, 4
    %vm1312 = vcmp.eq.s32.totalorder %v1245, 4
    %vm1313 = vcmp.eq.s32.totalorder %v1246, 4
    %v1314 = vsel %vm1306, 1, %v1298
    %v1315 = vsel %vm1307, 1, %v1299
    %v1316 = vsel %vm1308, 1, %v1300
    %v1317 = vsel %vm1309, 1, %v1301
    %v1318 = vsel %vm1310, 1, %v1302
    %v1319 = vsel %vm1311, 1, %v1303
    %v1320 = vsel %vm1312, 1, %v1304
    %v1321 = vsel %vm1313, 1, %v1305
    %v1322 = vmul.u32 %v1314, %v1250
    %v1323 = vmul.u32 %v1315, %v1251
    %v1324 = vmul.u32 %v1316, %v1252
    %v1325 = vmul.u32 %v1317, %v1253
    %v1326 = vmul.u32 %v1318, %v1254
    %v1327 = vmul.u32 %v1319, %v1255
    %v1328 = vmul.u32 %v1320, %v1256
    %v1329 = vmul.u32 %v1321, %v1257
    %v1330 = vadd.s32 %v1231, %v1322
    %v1331 = vadd.s32 %v1232, %v1323
    %v1332 = vadd.s32 %v1233, %v1324
    %v1333 = vadd.s32 %v1234, %v1325
    %v1334 = vadd.s32 %v1235, %v1326
    %v1335 = vadd.s32 %v1236, %v1327
    %v1336 = vadd.s32 %v1237, %v1328
    %v1337 = vadd.s32 %v1238, %v1329
    %v1338 = vsub.s32 %v1239, %v1250
    %v1339 = vsub.s32 %v1240, %v1251
    %v1340 = vsub.s32 %v1241, %v1252
    %v1341 = vsub.s32 %v1242, %v1253
    %v1342 = vsub.s32 %v1243, %v1254
    %v1343 = vsub.s32 %v1244, %v1255
    %v1344 = vsub.s32 %v1245, %v1256
    %v1345 = vsub.s32 %v1246, %v1257
    %s1346 = scalar_lea.vmem [#allocation2], 192
    %v1347 = vld [vmem:[%s1346] sm:$0xff]
    %v1348 = vld [vmem:[%s1346 + $0x8] sm:$0xff]
    %v1349 = vunpack.c.0.s8 %v1347
    %v1350 = vunpack.c.1.s8 %v1347
    %v1351 = vunpack.c.2.s8 %v1347
    %v1352 = vunpack.c.3.s8 %v1347
    %v1353 = vunpack.c.0.s8 %v1348
    %v1354 = vunpack.c.1.s8 %v1348
    %v1355 = vunpack.c.2.s8 %v1348
    %v1356 = vunpack.c.3.s8 %v1348
    %vm1357 = vcmp.eq.s32.totalorder %v1338, 1
    %vm1358 = vcmp.eq.s32.totalorder %v1339, 1
    %vm1359 = vcmp.eq.s32.totalorder %v1340, 1
    %vm1360 = vcmp.eq.s32.totalorder %v1341, 1
    %vm1361 = vcmp.eq.s32.totalorder %v1342, 1
    %vm1362 = vcmp.eq.s32.totalorder %v1343, 1
    %vm1363 = vcmp.eq.s32.totalorder %v1344, 1
    %vm1364 = vcmp.eq.s32.totalorder %v1345, 1
    %v1365 = vsel %vm1357, 3, 0
    %v1366 = vsel %vm1358, 3, 0
    %v1367 = vsel %vm1359, 3, 0
    %v1368 = vsel %vm1360, 3, 0
    %v1369 = vsel %vm1361, 3, 0
    %v1370 = vsel %vm1362, 3, 0
    %v1371 = vsel %vm1363, 3, 0
    %v1372 = vsel %vm1364, 3, 0
    %vm1373 = vcmp.eq.s32.totalorder %v1338, 2
    %vm1374 = vcmp.eq.s32.totalorder %v1339, 2
    %vm1375 = vcmp.eq.s32.totalorder %v1340, 2
    %vm1376 = vcmp.eq.s32.totalorder %v1341, 2
    %vm1377 = vcmp.eq.s32.totalorder %v1342, 2
    %vm1378 = vcmp.eq.s32.totalorder %v1343, 2
    %vm1379 = vcmp.eq.s32.totalorder %v1344, 2
    %vm1380 = vcmp.eq.s32.totalorder %v1345, 2
    %v1381 = vsel %vm1373, 3, %v1365
    %v1382 = vsel %vm1374, 3, %v1366
    %v1383 = vsel %vm1375, 3, %v1367
    %v1384 = vsel %vm1376, 3, %v1368
    %v1385 = vsel %vm1377, 3, %v1369
    %v1386 = vsel %vm1378, 3, %v1370
    %v1387 = vsel %vm1379, 3, %v1371
    %v1388 = vsel %vm1380, 3, %v1372
    %vm1389 = vcmp.eq.s32.totalorder %v1338, 3
    %vm1390 = vcmp.eq.s32.totalorder %v1339, 3
    %vm1391 = vcmp.eq.s32.totalorder %v1340, 3
    %vm1392 = vcmp.eq.s32.totalorder %v1341, 3
    %vm1393 = vcmp.eq.s32.totalorder %v1342, 3
    %vm1394 = vcmp.eq.s32.totalorder %v1343, 3
    %vm1395 = vcmp.eq.s32.totalorder %v1344, 3
    %vm1396 = vcmp.eq.s32.totalorder %v1345, 3
    %v1397 = vsel %vm1389, 1, %v1381
    %v1398 = vsel %vm1390, 1, %v1382
    %v1399 = vsel %vm1391, 1, %v1383
    %v1400 = vsel %vm1392, 1, %v1384
    %v1401 = vsel %vm1393, 1, %v1385
    %v1402 = vsel %vm1394, 1, %v1386
    %v1403 = vsel %vm1395, 1, %v1387
    %v1404 = vsel %vm1396, 1, %v1388
    %v1405 = vmul.u32 %v1397, %v1349
    %v1406 = vmul.u32 %v1398, %v1350
    %v1407 = vmul.u32 %v1399, %v1351
    %v1408 = vmul.u32 %v1400, %v1352
    %v1409 = vmul.u32 %v1401, %v1353
    %v1410 = vmul.u32 %v1402, %v1354
    %v1411 = vmul.u32 %v1403, %v1355
    %v1412 = vmul.u32 %v1404, %v1356
    %v1413 = vadd.s32 %v1330, %v1405
    %v1414 = vadd.s32 %v1331, %v1406
    %v1415 = vadd.s32 %v1332, %v1407
    %v1416 = vadd.s32 %v1333, %v1408
    %v1417 = vadd.s32 %v1334, %v1409
    %v1418 = vadd.s32 %v1335, %v1410
    %v1419 = vadd.s32 %v1336, %v1411
    %v1420 = vadd.s32 %v1337, %v1412
    %v1421 = vsub.s32 %v1338, %v1349
    %v1422 = vsub.s32 %v1339, %v1350
    %v1423 = vsub.s32 %v1340, %v1351
    %v1424 = vsub.s32 %v1341, %v1352
    %v1425 = vsub.s32 %v1342, %v1353
    %v1426 = vsub.s32 %v1343, %v1354
    %v1427 = vsub.s32 %v1344, %v1355
    %v1428 = vsub.s32 %v1345, %v1356
    %s1429 = scalar_lea.vmem [#allocation2], 208
    %v1430 = vld [vmem:[%s1429] sm:$0xff]
    %v1431 = vld [vmem:[%s1429 + $0x8] sm:$0xff]
    %v1432 = vunpack.c.0.s8 %v1430
    %v1433 = vunpack.c.1.s8 %v1430
    %v1434 = vunpack.c.2.s8 %v1430
    %v1435 = vunpack.c.3.s8 %v1430
    %v1436 = vunpack.c.0.s8 %v1431
    %v1437 = vunpack.c.1.s8 %v1431
    %v1438 = vunpack.c.2.s8 %v1431
    %v1439 = vunpack.c.3.s8 %v1431
    %vm1440 = vcmp.eq.s32.totalorder %v1421, 1
    %vm1441 = vcmp.eq.s32.totalorder %v1422, 1
    %vm1442 = vcmp.eq.s32.totalorder %v1423, 1
    %vm1443 = vcmp.eq.s32.totalorder %v1424, 1
    %vm1444 = vcmp.eq.s32.totalorder %v1425, 1
    %vm1445 = vcmp.eq.s32.totalorder %v1426, 1
    %vm1446 = vcmp.eq.s32.totalorder %v1427, 1
    %vm1447 = vcmp.eq.s32.totalorder %v1428, 1
    %v1448 = vsel %vm1440, 2, 0
    %v1449 = vsel %vm1441, 2, 0
    %v1450 = vsel %vm1442, 2, 0
    %v1451 = vsel %vm1443, 2, 0
    %v1452 = vsel %vm1444, 2, 0
    %v1453 = vsel %vm1445, 2, 0
    %v1454 = vsel %vm1446, 2, 0
    %v1455 = vsel %vm1447, 2, 0
    %vm1456 = vcmp.eq.s32.totalorder %v1421, 2
    %vm1457 = vcmp.eq.s32.totalorder %v1422, 2
    %vm1458 = vcmp.eq.s32.totalorder %v1423, 2
    %vm1459 = vcmp.eq.s32.totalorder %v1424, 2
    %vm1460 = vcmp.eq.s32.totalorder %v1425, 2
    %vm1461 = vcmp.eq.s32.totalorder %v1426, 2
    %vm1462 = vcmp.eq.s32.totalorder %v1427, 2
    %vm1463 = vcmp.eq.s32.totalorder %v1428, 2
    %v1464 = vsel %vm1456, 1, %v1448
    %v1465 = vsel %vm1457, 1, %v1449
    %v1466 = vsel %vm1458, 1, %v1450
    %v1467 = vsel %vm1459, 1, %v1451
    %v1468 = vsel %vm1460, 1, %v1452
    %v1469 = vsel %vm1461, 1, %v1453
    %v1470 = vsel %vm1462, 1, %v1454
    %v1471 = vsel %vm1463, 1, %v1455
    %v1472 = vmul.u32 %v1464, %v1432
    %v1473 = vmul.u32 %v1465, %v1433
    %v1474 = vmul.u32 %v1466, %v1434
    %v1475 = vmul.u32 %v1467, %v1435
    %v1476 = vmul.u32 %v1468, %v1436
    %v1477 = vmul.u32 %v1469, %v1437
    %v1478 = vmul.u32 %v1470, %v1438
    %v1479 = vmul.u32 %v1471, %v1439
    %v1480 = vadd.s32 %v1413, %v1472
    %v1481 = vadd.s32 %v1414, %v1473
    %v1482 = vadd.s32 %v1415, %v1474
    %v1483 = vadd.s32 %v1416, %v1475
    %v1484 = vadd.s32 %v1417, %v1476
    %v1485 = vadd.s32 %v1418, %v1477
    %v1486 = vadd.s32 %v1419, %v1478
    %v1487 = vadd.s32 %v1420, %v1479
    %v1488 = vsub.s32 %v1421, %v1432
    %v1489 = vsub.s32 %v1422, %v1433
    %v1490 = vsub.s32 %v1423, %v1434
    %v1491 = vsub.s32 %v1424, %v1435
    %v1492 = vsub.s32 %v1425, %v1436
    %v1493 = vsub.s32 %v1426, %v1437
    %v1494 = vsub.s32 %v1427, %v1438
    %v1495 = vsub.s32 %v1428, %v1439
    %s1496 = scalar_lea.vmem [#allocation2], 224
    %v1497 = vld [vmem:[%s1496] sm:$0xff]
    %v1498 = vld [vmem:[%s1496 + $0x8] sm:$0xff]
    %v1499 = vunpack.c.0.s8 %v1497
    %v1500 = vunpack.c.1.s8 %v1497
    %v1501 = vunpack.c.2.s8 %v1497
    %v1502 = vunpack.c.3.s8 %v1497
    %v1503 = vunpack.c.0.s8 %v1498
    %v1504 = vunpack.c.1.s8 %v1498
    %v1505 = vunpack.c.2.s8 %v1498
    %v1506 = vunpack.c.3.s8 %v1498
    %vm1507 = vcmp.eq.s32.totalorder %v1488, 1
    %vm1508 = vcmp.eq.s32.totalorder %v1489, 1
    %vm1509 = vcmp.eq.s32.totalorder %v1490, 1
    %vm1510 = vcmp.eq.s32.totalorder %v1491, 1
    %vm1511 = vcmp.eq.s32.totalorder %v1492, 1
    %vm1512 = vcmp.eq.s32.totalorder %v1493, 1
    %vm1513 = vcmp.eq.s32.totalorder %v1494, 1
    %vm1514 = vcmp.eq.s32.totalorder %v1495, 1
    %v1515 = vsel %vm1507, 1, 0
    %v1516 = vsel %vm1508, 1, 0
    %v1517 = vsel %vm1509, 1, 0
    %v1518 = vsel %vm1510, 1, 0
    %v1519 = vsel %vm1511, 1, 0
    %v1520 = vsel %vm1512, 1, 0
    %v1521 = vsel %vm1513, 1, 0
    %v1522 = vsel %vm1514, 1, 0
    %v1523 = vmul.u32 %v1515, %v1499
    %v1524 = vmul.u32 %v1516, %v1500
    %v1525 = vmul.u32 %v1517, %v1501
    %v1526 = vmul.u32 %v1518, %v1502
    %v1527 = vmul.u32 %v1519, %v1503
    %v1528 = vmul.u32 %v1520, %v1504
    %v1529 = vmul.u32 %v1521, %v1505
    %v1530 = vmul.u32 %v1522, %v1506
    %v1531 = vadd.s32 %v1480, %v1523
    %v1532 = vadd.s32 %v1481, %v1524
    %v1533 = vadd.s32 %v1482, %v1525
    %v1534 = vadd.s32 %v1483, %v1526
    %v1535 = vadd.s32 %v1484, %v1527
    %v1536 = vadd.s32 %v1485, %v1528
    %v1537 = vadd.s32 %v1486, %v1529
    %v1538 = vadd.s32 %v1487, %v1530
    %1539 = vst [vmem:[#allocation5] sm:$0xff] %v1531
    %1540 = vst [vmem:[#allocation5 + $0x8] sm:$0xff] %v1532
    %1541 = vst [vmem:[#allocation5 + $0x10] sm:$0xff] %v1533
    %1542 = vst [vmem:[#allocation5 + $0x18] sm:$0xff] %v1534
    %1543 = vst [vmem:[#allocation5 + $0x20] sm:$0xff] %v1535
    %1544 = vst [vmem:[#allocation5 + $0x28] sm:$0xff] %v1536
    %1545 = vst [vmem:[#allocation5 + $0x30] sm:$0xff] %v1537
    %1546 = vst [vmem:[#allocation5 + $0x38] sm:$0xff] %v1538
    // Predicated region
    $region10: #{tpu_custom_call.1} parent=1 // pred_check
      _
    $region11: #{tpu_custom_call.1} parent=1 // pred_check_branch
      %1548 = sbr.rel (0) target = $region13
    $region12: #{tpu_custom_call.1} parent=1 // pred_region
      %s1550 = ssub.s32 1024, 1024
      %1551 = vsyncadd [#allocation4], %s1550
      %s1552 = sshll.u32 [#allocation5], 4
      %s1553 = int_to_ptr.vmem [resolvable:$true] %s1552
      %1558 = dma.vmem_to_hbm [thread:$0]  %s1553, 1024, %s1, [#allocation4], 128, 128, 8
    $region13: #{tpu_custom_call.1} parent=1 // pred_fallthru
      _
    // Predicated region
    $region14: #{tpu_custom_call.1} parent=1 // pred_check
      _
    $region15: #{tpu_custom_call.1} parent=1 // pred_check_branch
      %1560 = sbr.rel (0) target = $region17
    $region16: #{tpu_custom_call.1} parent=1 // pred_region
      %1561 = dma.done [#allocation4], 1024
    $region17: #{tpu_custom_call.1} parent=1 // pred_fallthru
      _
    %1562 = vsyncpa [#allocation3], 1
    %1563 = vsyncpa [#allocation4], 1

</llo_original>
